<compile_context>
chip_gen: v7x
topology: tpu7x:2x2x1
jax: 0.10.0
libtpu: 0.0.40
codegen_flags: <defaults>
</compile_context>

<pallas_src>
import jax
import jax.numpy as jnp
import numpy as np
from jax.experimental import pallas as pl
from jax.experimental.pallas import tpu as pltpu


def _layernorm(x, gamma, beta, eps=1e-5):
    # PyTorch nn.LayerNorm: biased variance over the last dim, eps=1e-5.
    mu = jnp.mean(x, axis=-1, keepdims=True)
    var = jnp.mean(jnp.square(x - mu), axis=-1, keepdims=True)
    return (x - mu) * jax.lax.rsqrt(var + eps) * gamma + beta


def _make_kernel(num_heads, head_dim, tile_s, compute_dtype):
    H, hd, TS = num_heads, head_dim, tile_s

    def kernel(xq_ref, kt_ref, xv_ref,
               qg_ref, qb_ref, ng_ref, nb_ref, wp_ref,
               out_ref, osd_ref):
        # xq_ref block: (1, H, TS, hd) -- queries for this (batch, sequence-tile),
        # already in PyTorch's (B, H, S, hd) "reshape-quirk" order.
        xq = xq_ref[0]                                    # (H, TS, hd)  f32
        kt = kt_ref[0]                                    # (hd, N)      bf16, LN'd host-side
        xv = xv_ref[0]                                    # (N, hd)      bf16

        # Flatten heads into rows (row-major merge of leading dims): row r = h*TS + t.
        q = jnp.reshape(xq, (H * TS, hd))                 # (H*TS, hd)

        # q_norm = LayerNorm(head_dim); attention scale already folded into qg/qb.
        q = _layernorm(q, qg_ref[...], qb_ref[...])       # f32 stats

        # attn = einsum('bhsd,bnd->bhsn'): (H*TS, hd) @ (hd, N) -> (H*TS, N).
        # K is pre-transposed host-side -> layout-native matmul, lane-dense N output.
        attn = jax.lax.dot_general(
            q.astype(compute_dtype), kt,
            (((1,), (0,)), ((), ())), preferred_element_type=jnp.float32)

        # Numerically stable softmax over the key axis; normalization is DEFERRED
        # to after the PV matmul (scale (H*TS, hd) instead of (H*TS, N)).
        attn = attn - jnp.max(attn, axis=-1, keepdims=True)
        p = jnp.exp(attn)                                 # f32 EUP
        row_sum = jnp.sum(p, axis=-1, keepdims=True)      # (H*TS, 1) f32
        # attn_drop: p=0.0 -> identity

        # x = einsum('bhsn,bnd->bhsd'): (H*TS, N) @ (N, hd) -> (H*TS, hd)
        o = jax.lax.dot_general(
            p.astype(compute_dtype), xv,
            (((1,), (0,)), ((), ())), preferred_element_type=jnp.float32)
        o = o * pl.reciprocal(row_sum, approx=True)       # EUP slot, cheap rows

        # torch: x.transpose(1, 2).reshape(B, S, D).
        # Row h*TS + t of `o` belongs at output row t, columns [h*hd, (h+1)*hd).
        # Per-head column-slab stores into a (TS, D) VMEM scratch (no concat temp).
        for h in range(H):                                # static unroll
            osd_ref[:, h * hd:(h + 1) * hd] = o[h * TS:(h + 1) * TS, :]

        # scale_norm = LayerNorm(dim), then proj = Linear(dim, dim, bias=False):
        # y = x @ W^T; wp_ref already holds W^T (D_in, D_out) in compute dtype.
        o_sd = _layernorm(osd_ref[...], ng_ref[...], nb_ref[...])
        y = jax.lax.dot_general(
            o_sd.astype(compute_dtype), wp_ref[...],
            (((1,), (0,)), ((), ())), preferred_element_type=jnp.float32)
        # proj_drop: p=0.0 -> identity
        out_ref[0] = y.astype(out_ref.dtype)

    return kernel


def _vmem_limit_bytes():
    """~75% of this chip's physical VMEM per core, with a conservative fallback."""
    try:
        cap = int(pltpu.get_tpu_info().vmem_capacity_bytes)
        return max(32 * 1024 * 1024, (cap * 3) // 4)
    except Exception:
        return 64 * 1024 * 1024


def _choose_tile_s(S, H, N, vmem_limit, target=256):
    """Largest sequence tile <= target that divides S, multiple of 8, capped so the
    f32 (H*TS, N) score tile stays within ~1/3 of the VMEM budget."""
    cap_ts = max(8, vmem_limit // (3 * 4 * max(N, 1) * max(H, 1)))
    target = min(target, cap_ts)
    if S <= target:
        return S
    start = target - (target % 8)
    for cand in range(start, 7, -8):
        if S % cand == 0:
            return cand
    # TODO(synk): pad S (or tile N with an online softmax) when no divisor fits.
    return S


def multi_query_attention(x_q, x_k, x_v, params, num_heads,
                          tile_s=256, compute_dtype=jnp.bfloat16):
    B, S, D = x_q.shape
    _, N, hd = x_k.shape
    assert D % num_heads == 0 and D // num_heads == hd
    H = num_heads
    scale = float(hd) ** -0.5

    vmem_limit = _vmem_limit_bytes()
    TS = _choose_tile_s(S, H, N, vmem_limit, tile_s)
    n_s = S // TS

    # PyTorch's q.reshape(B, H, -1, hd): free row-major relabeling done host-side so
    # the kernel's S-tiles of x_q align with the S-tiles of the output.
    xq_r = x_q.reshape(B, H, S, hd)

    # Fold the attention scale into the q-norm affine parameters (gamma AND beta).
    q_gamma = params["q_gamma"] * scale
    q_beta = params["q_beta"] * scale

    # K: LayerNorm once (f32), cast to bf16, pre-transpose to (B, hd, N).
    k_n = _layernorm(x_k.astype(jnp.float32),
                     params["k_gamma"].reshape(1, 1, hd),
                     params["k_beta"].reshape(1, 1, hd))
    k_t = jnp.transpose(k_n, (0, 2, 1)).astype(compute_dtype)     # (B, hd, N)
    v_b = x_v.astype(compute_dtype)                               # (B, N, hd)

    # Projection weight pre-transposed to (D_in, D_out), bf16.
    w_proj_t = jnp.transpose(params["w_proj"]).astype(compute_dtype)

    kernel = _make_kernel(H, hd, TS, compute_dtype)

    cost = pl.CostEstimate(
        flops=4 * B * S * N * D + 2 * B * S * D * D,
        transcendentals=B * H * S * N,
        bytes_accessed=(B * S * D * 4            # x_q in
                        + B * hd * N * 2         # K^T (bf16)
                        + B * N * hd * 2         # V (bf16)
                        + D * D * 2              # W^T (bf16)
                        + B * S * D * 4))        # out

    def build_call(weight_single_buffered):
        if weight_single_buffered:
            w_spec = pl.BlockSpec((D, D), lambda b, si: (0, 0),
                                  pipeline_mode=pl.Buffered(1))
        else:
            w_spec = pl.BlockSpec((D, D), lambda b, si: (0, 0))
        in_specs = [
            pl.BlockSpec((1, H, TS, hd), lambda b, si: (b, 0, si, 0)),  # x_q (reshaped)
            pl.BlockSpec((1, hd, N), lambda b, si: (b, 0, 0)),          # K^T (normed, bf16)
            pl.BlockSpec((1, N, hd), lambda b, si: (b, 0, 0)),          # V (bf16)
            pl.BlockSpec((1, hd), lambda b, si: (0, 0)),                # q_norm gamma*scale
            pl.BlockSpec((1, hd), lambda b, si: (0, 0)),                # q_norm beta*scale
            pl.BlockSpec((1, D), lambda b, si: (0, 0)),                 # out norm gamma
            pl.BlockSpec((1, D), lambda b, si: (0, 0)),                 # out norm beta
            w_spec,                                                     # W^T (bf16)
        ]
        out_spec = pl.BlockSpec((1, TS, D), lambda b, si: (b, si, 0))
        return pl.pallas_call(
            kernel,
            out_shape=jax.ShapeDtypeStruct((B, S, D), x_q.dtype),
            grid=(B, n_s),
            in_specs=in_specs,
            out_specs=out_spec,
            scratch_shapes=[pltpu.VMEM((TS, D), jnp.float32)],
            cost_estimate=cost,
            compiler_params=pltpu.CompilerParams(
                dimension_semantics=("parallel", "parallel"),
                vmem_limit_bytes=int(vmem_limit)),
        )

    args = (xq_r, k_t, v_b, q_gamma, q_beta,
            params["n_gamma"], params["n_beta"], w_proj_t)
    try:
        return build_call(weight_single_buffered=True)(*args)
    except Exception:
        # Fallback for JAX versions that reject single-buffered BlockSpecs.
        return build_call(weight_single_buffered=False)(*args)


def reference(x_q, x_k, x_v, params, num_heads):
    """Pure-JAX f32 transcription of the PyTorch forward (for verification)."""
    B, S, D = x_q.shape
    hd = D // num_heads
    q = x_q.reshape(B, num_heads, -1, hd)
    q = _layernorm(q, params["q_gamma"].reshape(hd), params["q_beta"].reshape(hd))
    k = _layernorm(x_k, params["k_gamma"].reshape(hd), params["k_beta"].reshape(hd))
    q = q * hd ** -0.5
    attn = jnp.einsum('bhsd,bnd->bhsn', q, k)
    attn = jax.nn.softmax(attn, axis=-1)
    x = jnp.einsum('bhsn,bnd->bhsd', attn, x_v)
    x = jnp.transpose(x, (0, 2, 1, 3)).reshape(B, S, D)
    x = _layernorm(x, params["n_gamma"].reshape(D), params["n_beta"].reshape(D))
    return x @ params["w_proj"].T


if __name__ == "__main__":
    B, S, N = 2, 8, 16
    num_heads = 4
    D = 32
    hd = D // num_heads

    key = jax.random.PRNGKey(0)
    k_xq, k_xk, k_xv, k_w = jax.random.split(key, 4)

    x_q = jax.random.normal(k_xq, (B, S, D), dtype=jnp.float32)
    x_k = jax.random.normal(k_xk, (B, N, hd), dtype=jnp.float32)
    x_v = jax.random.normal(k_xv, (B, N, hd), dtype=jnp.float32)

    # Parameters matching the PyTorch module's reset_parameters():
    #   Linear proj: xavier_uniform_, no bias.  LayerNorms: gamma=1, beta=0.
    bound = float(np.sqrt(6.0 / (D + D)))
    w_proj = jax.random.uniform(k_w, (D, D), minval=-bound, maxval=bound,
                                dtype=jnp.float32)
    params = {
        "q_gamma": jnp.ones((1, hd), jnp.float32),
        "q_beta": jnp.zeros((1, hd), jnp.float32),
        "k_gamma": jnp.ones((1, hd), jnp.float32),
        "k_beta": jnp.zeros((1, hd), jnp.float32),
        "n_gamma": jnp.ones((1, D), jnp.float32),
        "n_beta": jnp.zeros((1, D), jnp.float32),
        "w_proj": w_proj,
    }

    out = multi_query_attention(x_q, x_k, x_v, params, num_heads)
    out = jax.block_until_ready(out)

    ref = jax.block_until_ready(reference(x_q, x_k, x_v, params, num_heads))
    # Tolerance accounts for intentional bf16 MXU operand casts and the approximate
    # softmax reciprocal inside the kernel (reference is pure f32).
    np.testing.assert_allclose(np.asarray(out), np.asarray(ref),
                               rtol=5e-2, atol=5e-2)

    print("KERNEL_OK")
</pallas_src>

<mosaic_0001>
module attributes {stable_mosaic.version = 11 : i64} {
  func.func @kernel(%arg0: i32, %arg1: i32, %arg2: memref<1x4x8x8xf32, #tpu.memory_space<vmem>>, %arg3: memref<1x8x16xbf16, #tpu.memory_space<vmem>>, %arg4: memref<1x16x8xbf16, #tpu.memory_space<vmem>>, %arg5: memref<1x8xf32, #tpu.memory_space<vmem>>, %arg6: memref<1x8xf32, #tpu.memory_space<vmem>>, %arg7: memref<1x32xf32, #tpu.memory_space<vmem>>, %arg8: memref<1x32xf32, #tpu.memory_space<vmem>>, %arg9: memref<32x32xbf16, #tpu.memory_space<vmem>>, %arg10: memref<1x8x32xf32, #tpu.memory_space<vmem>>, %arg11: memref<8x32xf32, #tpu.memory_space<vmem>>) attributes {dimension_semantics = [#tpu.dimension_semantics<parallel>, #tpu.dimension_semantics<parallel>], iteration_bounds = array<i64: 2, 1>, scalar_prefetch = 0 : i64, scratch_operands = 1 : i64, tpu.core_type = #tpu.core_type<tc>, window_params = [{transform_indices = @transform_0, window_bounds = array<i64: 1, 4, 8, 8>}, {transform_indices = @transform_1, window_bounds = array<i64: 1, 8, 16>}, {transform_indices = @transform_2, window_bounds = array<i64: 1, 16, 8>}, {pipeline_mode = #tpu.pipeline_mode<synchronous>, transform_indices = @transform_3, window_bounds = array<i64: 1, 8>}, {pipeline_mode = #tpu.pipeline_mode<synchronous>, transform_indices = @transform_4, window_bounds = array<i64: 1, 8>}, {pipeline_mode = #tpu.pipeline_mode<synchronous>, transform_indices = @transform_5, window_bounds = array<i64: 1, 32>}, {pipeline_mode = #tpu.pipeline_mode<synchronous>, transform_indices = @transform_6, window_bounds = array<i64: 1, 32>}, {pipeline_mode = #tpu.pipeline_mode<synchronous>, transform_indices = @transform_7, window_bounds = array<i64: 32, 32>}, {transform_indices = @transform_8, window_bounds = array<i64: 1, 8, 32>}]} {
    %c0 = arith.constant 0 : index
    %c0_0 = arith.constant 0 : index
    %c0_1 = arith.constant 0 : index
    %c0_2 = arith.constant 0 : index
    %0 = vector.load %arg2[%c0, %c0_0, %c0_1, %c0_2] : memref<1x4x8x8xf32, #tpu.memory_space<vmem>>, vector<1x4x8x8xf32>
    %1 = vector.shape_cast %0 : vector<1x4x8x8xf32> to vector<4x8x8xf32>
    %c0_3 = arith.constant 0 : index
    %c0_4 = arith.constant 0 : index
    %c0_5 = arith.constant 0 : index
    %2 = vector.load %arg3[%c0_3, %c0_4, %c0_5] : memref<1x8x16xbf16, #tpu.memory_space<vmem>>, vector<1x8x16xbf16>
    %3 = vector.shape_cast %2 : vector<1x8x16xbf16> to vector<8x16xbf16>
    %c0_6 = arith.constant 0 : index
    %c0_7 = arith.constant 0 : index
    %c0_8 = arith.constant 0 : index
    %4 = vector.load %arg4[%c0_6, %c0_7, %c0_8] : memref<1x16x8xbf16, #tpu.memory_space<vmem>>, vector<1x16x8xbf16>
    %5 = vector.shape_cast %4 : vector<1x16x8xbf16> to vector<16x8xbf16>
    %6 = vector.shape_cast %1 : vector<4x8x8xf32> to vector<32x8xf32>
    %c0_9 = arith.constant 0 : index
    %c0_10 = arith.constant 0 : index
    %7 = vector.load %arg5[%c0_9, %c0_10] : memref<1x8xf32, #tpu.memory_space<vmem>>, vector<1x8xf32>
    %c0_11 = arith.constant 0 : index
    %c0_12 = arith.constant 0 : index
    %8 = vector.load %arg6[%c0_11, %c0_12] : memref<1x8xf32, #tpu.memory_space<vmem>>, vector<1x8xf32>
    %cst = arith.constant dense<0.000000e+00> : vector<32xf32>
    %9 = vector.multi_reduction <add>, %6, %cst [1] : vector<32x8xf32> to vector<32xf32>
    %10 = vector.shape_cast %9 : vector<32xf32> to vector<32x1xf32>
    %cst_13 = arith.constant 8.000000e+00 : f32
    %11 = vector.broadcast %cst_13 : f32 to vector<32x1xf32>
    %12 = arith.divf %10, %11 : vector<32x1xf32>
    %13 = vector.broadcast %12 : vector<32x1xf32> to vector<32x8xf32>
    %14 = arith.subf %6, %13 : vector<32x8xf32>
    %15 = arith.mulf %14, %14 : vector<32x8xf32>
    %cst_14 = arith.constant dense<0.000000e+00> : vector<32xf32>
    %16 = vector.multi_reduction <add>, %15, %cst_14 [1] : vector<32x8xf32> to vector<32xf32>
    %17 = vector.shape_cast %16 : vector<32xf32> to vector<32x1xf32>
    %cst_15 = arith.constant 8.000000e+00 : f32
    %18 = vector.broadcast %cst_15 : f32 to vector<32x1xf32>
    %19 = arith.divf %17, %18 : vector<32x1xf32>
    %20 = vector.broadcast %12 : vector<32x1xf32> to vector<32x8xf32>
    %21 = arith.subf %6, %20 : vector<32x8xf32>
    %cst_16 = arith.constant 9.99999974E-6 : f32
    %22 = vector.broadcast %cst_16 : f32 to vector<32x1xf32>
    %23 = arith.addf %19, %22 : vector<32x1xf32>
    %24 = math.rsqrt %23 : vector<32x1xf32>
    %25 = vector.broadcast %24 : vector<32x1xf32> to vector<32x8xf32>
    %26 = arith.mulf %21, %25 : vector<32x8xf32>
    %27 = vector.broadcast %7 : vector<1x8xf32> to vector<32x8xf32>
    %28 = arith.mulf %26, %27 : vector<32x8xf32>
    %29 = vector.broadcast %8 : vector<1x8xf32> to vector<32x8xf32>
    %30 = arith.addf %28, %29 : vector<32x8xf32>
    %31 = arith.truncf %30 : vector<32x8xf32> to vector<32x8xbf16>
    %cst_17 = arith.constant dense<0.000000e+00> : vector<32x16xf32>
    %32 = tpu.matmul %31, %3, %cst_17 {dimension_numbers = #tpu.dot_dimension_numbers<[1], [0], [0], [1], [0, 0, 1, 1], [], []>} : vector<32x8xbf16>, vector<8x16xbf16>, vector<32x16xf32> -> vector<32x16xf32>
    %cst_18 = arith.constant dense<0xFF800000> : vector<32xf32>
    %33 = vector.multi_reduction <maximumf>, %32, %cst_18 [1] : vector<32x16xf32> to vector<32xf32>
    %34 = vector.shape_cast %33 : vector<32xf32> to vector<32x1xf32>
    %35 = vector.broadcast %34 : vector<32x1xf32> to vector<32x16xf32>
    %36 = arith.subf %32, %35 : vector<32x16xf32>
    %37 = math.exp %36 : vector<32x16xf32>
    %cst_19 = arith.constant dense<0.000000e+00> : vector<32xf32>
    %38 = vector.multi_reduction <add>, %37, %cst_19 [1] : vector<32x16xf32> to vector<32xf32>
    %39 = vector.shape_cast %38 : vector<32xf32> to vector<32x1xf32>
    %40 = arith.truncf %37 : vector<32x16xf32> to vector<32x16xbf16>
    %cst_20 = arith.constant dense<0.000000e+00> : vector<32x8xf32>
    %41 = tpu.matmul %40, %5, %cst_20 {dimension_numbers = #tpu.dot_dimension_numbers<[1], [0], [0], [1], [0, 0, 1, 1], [], []>} : vector<32x16xbf16>, vector<16x8xbf16>, vector<32x8xf32> -> vector<32x8xf32>
    %42 = tpu.reciprocal %39 {approx = true} : vector<32x1xf32> -> vector<32x1xf32>
    %43 = vector.broadcast %42 : vector<32x1xf32> to vector<32x8xf32>
    %44 = arith.mulf %41, %43 : vector<32x8xf32>
    %45 = vector.extract_strided_slice %44 {offsets = [0, 0], sizes = [8, 8], strides = [1, 1]} : vector<32x8xf32> to vector<8x8xf32>
    %c0_21 = arith.constant 0 : index
    %c0_22 = arith.constant 0 : index
    %46 = vector.load %arg11[%c0_21, %c0_22] : memref<8x32xf32, #tpu.memory_space<vmem>>, vector<8x8xf32>
    tpu.vector_store %arg11[%c0_21, %c0_22], %45 {strides = array<i32>} : memref<8x32xf32, #tpu.memory_space<vmem>>, vector<8x8xf32>,
    %47 = vector.extract_strided_slice %44 {offsets = [8, 0], sizes = [8, 8], strides = [1, 1]} : vector<32x8xf32> to vector<8x8xf32>
    %c0_23 = arith.constant 0 : index
    %c8 = arith.constant 8 : index
    %48 = vector.load %arg11[%c0_23, %c8] : memref<8x32xf32, #tpu.memory_space<vmem>>, vector<8x8xf32>
    tpu.vector_store %arg11[%c0_23, %c8], %47 {strides = array<i32>} : memref<8x32xf32, #tpu.memory_space<vmem>>, vector<8x8xf32>,
    %49 = vector.extract_strided_slice %44 {offsets = [16, 0], sizes = [8, 8], strides = [1, 1]} : vector<32x8xf32> to vector<8x8xf32>
    %c0_24 = arith.constant 0 : index
    %c16 = arith.constant 16 : index
    %50 = vector.load %arg11[%c0_24, %c16] : memref<8x32xf32, #tpu.memory_space<vmem>>, vector<8x8xf32>
    tpu.vector_store %arg11[%c0_24, %c16], %49 {strides = array<i32>} : memref<8x32xf32, #tpu.memory_space<vmem>>, vector<8x8xf32>,
    %51 = vector.extract_strided_slice %44 {offsets = [24, 0], sizes = [8, 8], strides = [1, 1]} : vector<32x8xf32> to vector<8x8xf32>
    %c0_25 = arith.constant 0 : index
    %c24 = arith.constant 24 : index
    %52 = vector.load %arg11[%c0_25, %c24] : memref<8x32xf32, #tpu.memory_space<vmem>>, vector<8x8xf32>
    tpu.vector_store %arg11[%c0_25, %c24], %51 {strides = array<i32>} : memref<8x32xf32, #tpu.memory_space<vmem>>, vector<8x8xf32>,
    %c0_26 = arith.constant 0 : index
    %c0_27 = arith.constant 0 : index
    %53 = vector.load %arg11[%c0_26, %c0_27] : memref<8x32xf32, #tpu.memory_space<vmem>>, vector<8x32xf32>
    %c0_28 = arith.constant 0 : index
    %c0_29 = arith.constant 0 : index
    %54 = vector.load %arg7[%c0_28, %c0_29] : memref<1x32xf32, #tpu.memory_space<vmem>>, vector<1x32xf32>
    %c0_30 = arith.constant 0 : index
    %c0_31 = arith.constant 0 : index
    %55 = vector.load %arg8[%c0_30, %c0_31] : memref<1x32xf32, #tpu.memory_space<vmem>>, vector<1x32xf32>
    %cst_32 = arith.constant dense<0.000000e+00> : vector<8xf32>
    %56 = vector.multi_reduction <add>, %53, %cst_32 [1] : vector<8x32xf32> to vector<8xf32>
    %57 = vector.shape_cast %56 : vector<8xf32> to vector<8x1xf32>
    %cst_33 = arith.constant 3.200000e+01 : f32
    %58 = vector.broadcast %cst_33 : f32 to vector<8x1xf32>
    %59 = arith.divf %57, %58 : vector<8x1xf32>
    %60 = vector.broadcast %59 : vector<8x1xf32> to vector<8x32xf32>
    %61 = arith.subf %53, %60 : vector<8x32xf32>
    %62 = arith.mulf %61, %61 : vector<8x32xf32>
    %cst_34 = arith.constant dense<0.000000e+00> : vector<8xf32>
    %63 = vector.multi_reduction <add>, %62, %cst_34 [1] : vector<8x32xf32> to vector<8xf32>
    %64 = vector.shape_cast %63 : vector<8xf32> to vector<8x1xf32>
    %cst_35 = arith.constant 3.200000e+01 : f32
    %65 = vector.broadcast %cst_35 : f32 to vector<8x1xf32>
    %66 = arith.divf %64, %65 : vector<8x1xf32>
    %67 = vector.broadcast %59 : vector<8x1xf32> to vector<8x32xf32>
    %68 = arith.subf %53, %67 : vector<8x32xf32>
    %cst_36 = arith.constant 9.99999974E-6 : f32
    %69 = vector.broadcast %cst_36 : f32 to vector<8x1xf32>
    %70 = arith.addf %66, %69 : vector<8x1xf32>
    %71 = math.rsqrt %70 : vector<8x1xf32>
    %72 = vector.broadcast %71 : vector<8x1xf32> to vector<8x32xf32>
    %73 = arith.mulf %68, %72 : vector<8x32xf32>
    %74 = vector.broadcast %54 : vector<1x32xf32> to vector<8x32xf32>
    %75 = arith.mulf %73, %74 : vector<8x32xf32>
    %76 = vector.broadcast %55 : vector<1x32xf32> to vector<8x32xf32>
    %77 = arith.addf %75, %76 : vector<8x32xf32>
    %78 = arith.truncf %77 : vector<8x32xf32> to vector<8x32xbf16>
    %c0_37 = arith.constant 0 : index
    %c0_38 = arith.constant 0 : index
    %79 = vector.load %arg9[%c0_37, %c0_38] : memref<32x32xbf16, #tpu.memory_space<vmem>>, vector<32x32xbf16>
    %cst_39 = arith.constant dense<0.000000e+00> : vector<8x32xf32>
    %80 = tpu.matmul %78, %79, %cst_39 {dimension_numbers = #tpu.dot_dimension_numbers<[1], [0], [0], [1], [0, 0, 1, 1], [], []>} : vector<8x32xbf16>, vector<32x32xbf16>, vector<8x32xf32> -> vector<8x32xf32>
    %c0_40 = arith.constant 0 : index
    %c0_41 = arith.constant 0 : index
    %c0_42 = arith.constant 0 : index
    %81 = vector.load %arg10[%c0_40, %c0_41, %c0_42] : memref<1x8x32xf32, #tpu.memory_space<vmem>>, vector<1x8x32xf32>
    %82 = vector.shape_cast %81 : vector<1x8x32xf32> to vector<8x32xf32>
    %83 = vector.shape_cast %80 : vector<8x32xf32> to vector<1x8x32xf32>
    tpu.vector_store %arg10[%c0_40, %c0_41, %c0_42], %83 {strides = array<i32>} : memref<1x8x32xf32, #tpu.memory_space<vmem>>, vector<1x8x32xf32>,
    return
  }
  func.func @transform_0(%arg0: i32, %arg1: i32) -> (i32, i32, i32, i32) {
    %c0_i32 = arith.constant 0 : i32
    %c0_i32_0 = arith.constant 0 : i32
    %c0_i32_1 = arith.constant 0 : i32
    return %arg0, %c0_i32, %arg1, %c0_i32_0 : i32, i32, i32, i32
  }
  func.func @transform_1(%arg0: i32, %arg1: i32) -> (i32, i32, i32) {
    %c0_i32 = arith.constant 0 : i32
    %c0_i32_0 = arith.constant 0 : i32
    %c0_i32_1 = arith.constant 0 : i32
    return %arg0, %c0_i32, %c0_i32_0 : i32, i32, i32
  }
  func.func @transform_2(%arg0: i32, %arg1: i32) -> (i32, i32, i32) {
    %c0_i32 = arith.constant 0 : i32
    %c0_i32_0 = arith.constant 0 : i32
    %c0_i32_1 = arith.constant 0 : i32
    return %arg0, %c0_i32, %c0_i32_0 : i32, i32, i32
  }
  func.func @transform_3(%arg0: i32, %arg1: i32) -> (i32, i32) {
    %c0_i32 = arith.constant 0 : i32
    %c0_i32_0 = arith.constant 0 : i32
    %c0_i32_1 = arith.constant 0 : i32
    return %c0_i32, %c0_i32_0 : i32, i32
  }
  func.func @transform_4(%arg0: i32, %arg1: i32) -> (i32, i32) {
    %c0_i32 = arith.constant 0 : i32
    %c0_i32_0 = arith.constant 0 : i32
    %c0_i32_1 = arith.constant 0 : i32
    return %c0_i32, %c0_i32_0 : i32, i32
  }
  func.func @transform_5(%arg0: i32, %arg1: i32) -> (i32, i32) {
    %c0_i32 = arith.constant 0 : i32
    %c0_i32_0 = arith.constant 0 : i32
    %c0_i32_1 = arith.constant 0 : i32
    return %c0_i32, %c0_i32_0 : i32, i32
  }
  func.func @transform_6(%arg0: i32, %arg1: i32) -> (i32, i32) {
    %c0_i32 = arith.constant 0 : i32
    %c0_i32_0 = arith.constant 0 : i32
    %c0_i32_1 = arith.constant 0 : i32
    return %c0_i32, %c0_i32_0 : i32, i32
  }
  func.func @transform_7(%arg0: i32, %arg1: i32) -> (i32, i32) {
    %c0_i32 = arith.constant 0 : i32
    %c0_i32_0 = arith.constant 0 : i32
    %c0_i32_1 = arith.constant 0 : i32
    return %c0_i32, %c0_i32_0 : i32, i32
  }
  func.func @transform_8(%arg0: i32, %arg1: i32) -> (i32, i32, i32) {
    %c0_i32 = arith.constant 0 : i32
    %c0_i32_0 = arith.constant 0 : i32
    return %arg0, %arg1, %c0_i32 : i32, i32, i32
  }
}

module attributes {stable_mosaic.version = 11 : i64} {
  func.func @kernel(%arg0: i32, %arg1: i32, %arg2: memref<1x4x8x8xf32, #tpu.memory_space<vmem>>, %arg3: memref<1x8x16xbf16, #tpu.memory_space<vmem>>, %arg4: memref<1x16x8xbf16, #tpu.memory_space<vmem>>, %arg5: memref<1x8xf32, #tpu.memory_space<vmem>>, %arg6: memref<1x8xf32, #tpu.memory_space<vmem>>, %arg7: memref<1x32xf32, #tpu.memory_space<vmem>>, %arg8: memref<1x32xf32, #tpu.memory_space<vmem>>, %arg9: memref<32x32xbf16, #tpu.memory_space<vmem>>, %arg10: memref<1x8x32xf32, #tpu.memory_space<vmem>>, %arg11: memref<8x32xf32, #tpu.memory_space<vmem>>) attributes {dimension_semantics = [#tpu.dimension_semantics<parallel>, #tpu.dimension_semantics<parallel>], iteration_bounds = array<i64: 2, 1>, scalar_prefetch = 0 : i64, scratch_operands = 1 : i64, tpu.core_type = #tpu.core_type<tc>, window_params = [{transform_indices = @transform_0, window_bounds = array<i64: 1, 4, 8, 8>}, {transform_indices = @transform_1, window_bounds = array<i64: 1, 8, 16>}, {transform_indices = @transform_2, window_bounds = array<i64: 1, 16, 8>}, {pipeline_mode = #tpu.pipeline_mode<synchronous>, transform_indices = @transform_3, window_bounds = array<i64: 1, 8>}, {pipeline_mode = #tpu.pipeline_mode<synchronous>, transform_indices = @transform_4, window_bounds = array<i64: 1, 8>}, {pipeline_mode = #tpu.pipeline_mode<synchronous>, transform_indices = @transform_5, window_bounds = array<i64: 1, 32>}, {pipeline_mode = #tpu.pipeline_mode<synchronous>, transform_indices = @transform_6, window_bounds = array<i64: 1, 32>}, {pipeline_mode = #tpu.pipeline_mode<synchronous>, transform_indices = @transform_7, window_bounds = array<i64: 32, 32>}, {transform_indices = @transform_8, window_bounds = array<i64: 1, 8, 32>}]} {
    %c0 = arith.constant 0 : index
    %c0_0 = arith.constant 0 : index
    %c0_1 = arith.constant 0 : index
    %c0_2 = arith.constant 0 : index
    %0 = vector.load %arg2[%c0, %c0_0, %c0_1, %c0_2] : memref<1x4x8x8xf32, #tpu.memory_space<vmem>>, vector<1x4x8x8xf32>
    %1 = vector.shape_cast %0 : vector<1x4x8x8xf32> to vector<4x8x8xf32>
    %c0_3 = arith.constant 0 : index
    %c0_4 = arith.constant 0 : index
    %c0_5 = arith.constant 0 : index
    %2 = vector.load %arg3[%c0_3, %c0_4, %c0_5] : memref<1x8x16xbf16, #tpu.memory_space<vmem>>, vector<1x8x16xbf16>
    %3 = vector.shape_cast %2 : vector<1x8x16xbf16> to vector<8x16xbf16>
    %c0_6 = arith.constant 0 : index
    %c0_7 = arith.constant 0 : index
    %c0_8 = arith.constant 0 : index
    %4 = vector.load %arg4[%c0_6, %c0_7, %c0_8] : memref<1x16x8xbf16, #tpu.memory_space<vmem>>, vector<1x16x8xbf16>
    %5 = vector.shape_cast %4 : vector<1x16x8xbf16> to vector<16x8xbf16>
    %6 = vector.shape_cast %1 : vector<4x8x8xf32> to vector<32x8xf32>
    %c0_9 = arith.constant 0 : index
    %c0_10 = arith.constant 0 : index
    %7 = vector.load %arg5[%c0_9, %c0_10] : memref<1x8xf32, #tpu.memory_space<vmem>>, vector<1x8xf32>
    %c0_11 = arith.constant 0 : index
    %c0_12 = arith.constant 0 : index
    %8 = vector.load %arg6[%c0_11, %c0_12] : memref<1x8xf32, #tpu.memory_space<vmem>>, vector<1x8xf32>
    %cst = arith.constant dense<0.000000e+00> : vector<32xf32>
    %9 = vector.multi_reduction <add>, %6, %cst [1] : vector<32x8xf32> to vector<32xf32>
    %10 = vector.shape_cast %9 : vector<32xf32> to vector<32x1xf32>
    %cst_13 = arith.constant 8.000000e+00 : f32
    %11 = vector.broadcast %cst_13 : f32 to vector<32x1xf32>
    %12 = arith.divf %10, %11 : vector<32x1xf32>
    %13 = vector.broadcast %12 : vector<32x1xf32> to vector<32x8xf32>
    %14 = arith.subf %6, %13 : vector<32x8xf32>
    %15 = arith.mulf %14, %14 : vector<32x8xf32>
    %cst_14 = arith.constant dense<0.000000e+00> : vector<32xf32>
    %16 = vector.multi_reduction <add>, %15, %cst_14 [1] : vector<32x8xf32> to vector<32xf32>
    %17 = vector.shape_cast %16 : vector<32xf32> to vector<32x1xf32>
    %cst_15 = arith.constant 8.000000e+00 : f32
    %18 = vector.broadcast %cst_15 : f32 to vector<32x1xf32>
    %19 = arith.divf %17, %18 : vector<32x1xf32>
    %20 = vector.broadcast %12 : vector<32x1xf32> to vector<32x8xf32>
    %21 = arith.subf %6, %20 : vector<32x8xf32>
    %cst_16 = arith.constant 9.99999974E-6 : f32
    %22 = vector.broadcast %cst_16 : f32 to vector<32x1xf32>
    %23 = arith.addf %19, %22 : vector<32x1xf32>
    %24 = math.rsqrt %23 : vector<32x1xf32>
    %25 = vector.broadcast %24 : vector<32x1xf32> to vector<32x8xf32>
    %26 = arith.mulf %21, %25 : vector<32x8xf32>
    %27 = vector.broadcast %7 : vector<1x8xf32> to vector<32x8xf32>
    %28 = arith.mulf %26, %27 : vector<32x8xf32>
    %29 = vector.broadcast %8 : vector<1x8xf32> to vector<32x8xf32>
    %30 = arith.addf %28, %29 : vector<32x8xf32>
    %31 = arith.truncf %30 : vector<32x8xf32> to vector<32x8xbf16>
    %cst_17 = arith.constant dense<0.000000e+00> : vector<32x16xf32>
    %32 = tpu.matmul %31, %3, %cst_17 {dimension_numbers = #tpu.dot_dimension_numbers<[1], [0], [0], [1], [0, 0, 1, 1], [], []>} : vector<32x8xbf16>, vector<8x16xbf16>, vector<32x16xf32> -> vector<32x16xf32>
    %cst_18 = arith.constant dense<0xFF800000> : vector<32xf32>
    %33 = vector.multi_reduction <maximumf>, %32, %cst_18 [1] : vector<32x16xf32> to vector<32xf32>
    %34 = vector.shape_cast %33 : vector<32xf32> to vector<32x1xf32>
    %35 = vector.broadcast %34 : vector<32x1xf32> to vector<32x16xf32>
    %36 = arith.subf %32, %35 : vector<32x16xf32>
    %37 = math.exp %36 : vector<32x16xf32>
    %cst_19 = arith.constant dense<0.000000e+00> : vector<32xf32>
    %38 = vector.multi_reduction <add>, %37, %cst_19 [1] : vector<32x16xf32> to vector<32xf32>
    %39 = vector.shape_cast %38 : vector<32xf32> to vector<32x1xf32>
    %40 = arith.truncf %37 : vector<32x16xf32> to vector<32x16xbf16>
    %cst_20 = arith.constant dense<0.000000e+00> : vector<32x8xf32>
    %41 = tpu.matmul %40, %5, %cst_20 {dimension_numbers = #tpu.dot_dimension_numbers<[1], [0], [0], [1], [0, 0, 1, 1], [], []>} : vector<32x16xbf16>, vector<16x8xbf16>, vector<32x8xf32> -> vector<32x8xf32>
    %42 = tpu.reciprocal %39 {approx = true} : vector<32x1xf32> -> vector<32x1xf32>
    %43 = vector.broadcast %42 : vector<32x1xf32> to vector<32x8xf32>
    %44 = arith.mulf %41, %43 : vector<32x8xf32>
    %45 = vector.extract_strided_slice %44 {offsets = [0, 0], sizes = [8, 8], strides = [1, 1]} : vector<32x8xf32> to vector<8x8xf32>
    %c0_21 = arith.constant 0 : index
    %c0_22 = arith.constant 0 : index
    %46 = vector.load %arg11[%c0_21, %c0_22] : memref<8x32xf32, #tpu.memory_space<vmem>>, vector<8x8xf32>
    tpu.vector_store %arg11[%c0_21, %c0_22], %45 {strides = array<i32>} : memref<8x32xf32, #tpu.memory_space<vmem>>, vector<8x8xf32>,
    %47 = vector.extract_strided_slice %44 {offsets = [8, 0], sizes = [8, 8], strides = [1, 1]} : vector<32x8xf32> to vector<8x8xf32>
    %c0_23 = arith.constant 0 : index
    %c8 = arith.constant 8 : index
    %48 = vector.load %arg11[%c0_23, %c8] : memref<8x32xf32, #tpu.memory_space<vmem>>, vector<8x8xf32>
    tpu.vector_store %arg11[%c0_23, %c8], %47 {strides = array<i32>} : memref<8x32xf32, #tpu.memory_space<vmem>>, vector<8x8xf32>,
    %49 = vector.extract_strided_slice %44 {offsets = [16, 0], sizes = [8, 8], strides = [1, 1]} : vector<32x8xf32> to vector<8x8xf32>
    %c0_24 = arith.constant 0 : index
    %c16 = arith.constant 16 : index
    %50 = vector.load %arg11[%c0_24, %c16] : memref<8x32xf32, #tpu.memory_space<vmem>>, vector<8x8xf32>
    tpu.vector_store %arg11[%c0_24, %c16], %49 {strides = array<i32>} : memref<8x32xf32, #tpu.memory_space<vmem>>, vector<8x8xf32>,
    %51 = vector.extract_strided_slice %44 {offsets = [24, 0], sizes = [8, 8], strides = [1, 1]} : vector<32x8xf32> to vector<8x8xf32>
    %c0_25 = arith.constant 0 : index
    %c24 = arith.constant 24 : index
    %52 = vector.load %arg11[%c0_25, %c24] : memref<8x32xf32, #tpu.memory_space<vmem>>, vector<8x8xf32>
    tpu.vector_store %arg11[%c0_25, %c24], %51 {strides = array<i32>} : memref<8x32xf32, #tpu.memory_space<vmem>>, vector<8x8xf32>,
    %c0_26 = arith.constant 0 : index
    %c0_27 = arith.constant 0 : index
    %53 = vector.load %arg11[%c0_26, %c0_27] : memref<8x32xf32, #tpu.memory_space<vmem>>, vector<8x32xf32>
    %c0_28 = arith.constant 0 : index
    %c0_29 = arith.constant 0 : index
    %54 = vector.load %arg7[%c0_28, %c0_29] : memref<1x32xf32, #tpu.memory_space<vmem>>, vector<1x32xf32>
    %c0_30 = arith.constant 0 : index
    %c0_31 = arith.constant 0 : index
    %55 = vector.load %arg8[%c0_30, %c0_31] : memref<1x32xf32, #tpu.memory_space<vmem>>, vector<1x32xf32>
    %cst_32 = arith.constant dense<0.000000e+00> : vector<8xf32>
    %56 = vector.multi_reduction <add>, %53, %cst_32 [1] : vector<8x32xf32> to vector<8xf32>
    %57 = vector.shape_cast %56 : vector<8xf32> to vector<8x1xf32>
    %cst_33 = arith.constant 3.200000e+01 : f32
    %58 = vector.broadcast %cst_33 : f32 to vector<8x1xf32>
    %59 = arith.divf %57, %58 : vector<8x1xf32>
    %60 = vector.broadcast %59 : vector<8x1xf32> to vector<8x32xf32>
    %61 = arith.subf %53, %60 : vector<8x32xf32>
    %62 = arith.mulf %61, %61 : vector<8x32xf32>
    %cst_34 = arith.constant dense<0.000000e+00> : vector<8xf32>
    %63 = vector.multi_reduction <add>, %62, %cst_34 [1] : vector<8x32xf32> to vector<8xf32>
    %64 = vector.shape_cast %63 : vector<8xf32> to vector<8x1xf32>
    %cst_35 = arith.constant 3.200000e+01 : f32
    %65 = vector.broadcast %cst_35 : f32 to vector<8x1xf32>
    %66 = arith.divf %64, %65 : vector<8x1xf32>
    %67 = vector.broadcast %59 : vector<8x1xf32> to vector<8x32xf32>
    %68 = arith.subf %53, %67 : vector<8x32xf32>
    %cst_36 = arith.constant 9.99999974E-6 : f32
    %69 = vector.broadcast %cst_36 : f32 to vector<8x1xf32>
    %70 = arith.addf %66, %69 : vector<8x1xf32>
    %71 = math.rsqrt %70 : vector<8x1xf32>
    %72 = vector.broadcast %71 : vector<8x1xf32> to vector<8x32xf32>
    %73 = arith.mulf %68, %72 : vector<8x32xf32>
    %74 = vector.broadcast %54 : vector<1x32xf32> to vector<8x32xf32>
    %75 = arith.mulf %73, %74 : vector<8x32xf32>
    %76 = vector.broadcast %55 : vector<1x32xf32> to vector<8x32xf32>
    %77 = arith.addf %75, %76 : vector<8x32xf32>
    %78 = arith.truncf %77 : vector<8x32xf32> to vector<8x32xbf16>
    %c0_37 = arith.constant 0 : index
    %c0_38 = arith.constant 0 : index
    %79 = vector.load %arg9[%c0_37, %c0_38] : memref<32x32xbf16, #tpu.memory_space<vmem>>, vector<32x32xbf16>
    %cst_39 = arith.constant dense<0.000000e+00> : vector<8x32xf32>
    %80 = tpu.matmul %78, %79, %cst_39 {dimension_numbers = #tpu.dot_dimension_numbers<[1], [0], [0], [1], [0, 0, 1, 1], [], []>} : vector<8x32xbf16>, vector<32x32xbf16>, vector<8x32xf32> -> vector<8x32xf32>
    %c0_40 = arith.constant 0 : index
    %c0_41 = arith.constant 0 : index
    %c0_42 = arith.constant 0 : index
    %81 = vector.load %arg10[%c0_40, %c0_41, %c0_42] : memref<1x8x32xf32, #tpu.memory_space<vmem>>, vector<1x8x32xf32>
    %82 = vector.shape_cast %81 : vector<1x8x32xf32> to vector<8x32xf32>
    %83 = vector.shape_cast %80 : vector<8x32xf32> to vector<1x8x32xf32>
    tpu.vector_store %arg10[%c0_40, %c0_41, %c0_42], %83 {strides = array<i32>} : memref<1x8x32xf32, #tpu.memory_space<vmem>>, vector<1x8x32xf32>,
    return
  }
  func.func @transform_0(%arg0: i32, %arg1: i32) -> (i32, i32, i32, i32) {
    %c0_i32 = arith.constant 0 : i32
    %c0_i32_0 = arith.constant 0 : i32
    %c0_i32_1 = arith.constant 0 : i32
    return %arg0, %c0_i32, %arg1, %c0_i32_0 : i32, i32, i32, i32
  }
  func.func @transform_1(%arg0: i32, %arg1: i32) -> (i32, i32, i32) {
    %c0_i32 = arith.constant 0 : i32
    %c0_i32_0 = arith.constant 0 : i32
    %c0_i32_1 = arith.constant 0 : i32
    return %arg0, %c0_i32, %c0_i32_0 : i32, i32, i32
  }
  func.func @transform_2(%arg0: i32, %arg1: i32) -> (i32, i32, i32) {
    %c0_i32 = arith.constant 0 : i32
    %c0_i32_0 = arith.constant 0 : i32
    %c0_i32_1 = arith.constant 0 : i32
    return %arg0, %c0_i32, %c0_i32_0 : i32, i32, i32
  }
  func.func @transform_3(%arg0: i32, %arg1: i32) -> (i32, i32) {
    %c0_i32 = arith.constant 0 : i32
    %c0_i32_0 = arith.constant 0 : i32
    %c0_i32_1 = arith.constant 0 : i32
    return %c0_i32, %c0_i32_0 : i32, i32
  }
  func.func @transform_4(%arg0: i32, %arg1: i32) -> (i32, i32) {
    %c0_i32 = arith.constant 0 : i32
    %c0_i32_0 = arith.constant 0 : i32
    %c0_i32_1 = arith.constant 0 : i32
    return %c0_i32, %c0_i32_0 : i32, i32
  }
  func.func @transform_5(%arg0: i32, %arg1: i32) -> (i32, i32) {
    %c0_i32 = arith.constant 0 : i32
    %c0_i32_0 = arith.constant 0 : i32
    %c0_i32_1 = arith.constant 0 : i32
    return %c0_i32, %c0_i32_0 : i32, i32
  }
  func.func @transform_6(%arg0: i32, %arg1: i32) -> (i32, i32) {
    %c0_i32 = arith.constant 0 : i32
    %c0_i32_0 = arith.constant 0 : i32
    %c0_i32_1 = arith.constant 0 : i32
    return %c0_i32, %c0_i32_0 : i32, i32
  }
  func.func @transform_7(%arg0: i32, %arg1: i32) -> (i32, i32) {
    %c0_i32 = arith.constant 0 : i32
    %c0_i32_0 = arith.constant 0 : i32
    %c0_i32_1 = arith.constant 0 : i32
    return %c0_i32, %c0_i32_0 : i32, i32
  }
  func.func @transform_8(%arg0: i32, %arg1: i32) -> (i32, i32, i32) {
    %c0_i32 = arith.constant 0 : i32
    %c0_i32_0 = arith.constant 0 : i32
    return %arg0, %arg1, %c0_i32 : i32, i32, i32
  }
}

</mosaic_0001>

<llo_original>
// kernel: tpu_custom_call.1
$region0: #{tpu_custom_call.1}
  #allocation0 [shape = 'u32[]', space=smem, size = 0x4, offset = 0x4, fixed_abs, tag = 'smem constant byte address 0x4 - core index']
  #allocation1 [shape = 'u32[144,128]{1,0:T(1,128)}', space=vmem, size = 0x12000, scoped, tag = 'internal scratch']
  #allocation2 [shape = 'f32[8,32]{1,0:T(8,128)}', space=vmem, size = 0x1000, scoped, tag = 'scratch operand']
  %s0 = inlined_call_operand.hbm [shape: f32[2,4,8,8], index: 0, kind: input, shape index: {}]
  %s1 = inlined_call_operand.hbm [shape: bf16[2,8,16], index: 1, kind: input, shape index: {}]
  %s2 = inlined_call_operand.hbm [shape: bf16[2,16,8], index: 2, kind: input, shape index: {}]
  %s3 = inlined_call_operand.hbm [shape: f32[1,8], index: 3, kind: input, shape index: {}]
  %s4 = inlined_call_operand.hbm [shape: f32[1,8], index: 4, kind: input, shape index: {}]
  %s5 = inlined_call_operand.hbm [shape: f32[1,32], index: 5, kind: input, shape index: {}]
  %s6 = inlined_call_operand.hbm [shape: f32[1,32], index: 6, kind: input, shape index: {}]
  %s7 = inlined_call_operand.hbm [shape: bf16[32,32], index: 7, kind: input, shape index: {}]
  %s8 = inlined_call_operand.hbm [shape: f32[2,8,32], index: 8, kind: output, shape index: {}]
  %s9 = sld [smem:[#allocation0]]
  $region97: #{tpu_custom_call.1} parent=0
    _
  %s11 = ssub.s32 1, %s9
  %s12 = scalar_select 0, %s11, %s9
  $region1: #{tpu_custom_call.1} parent=0
    #allocation3 [shape = 'u8[32768]{0}', space=vmem, size = 0x8000, scoped, tag = 'input window, operand 0']
    #allocation4 [shape = 's32[2]{0}', space=sflag, size = 0x8, scoped, tag = 'scoped memory for tpu_custom_call.1']
    #allocation5 [shape = 's32[2]{0}', space=sflag, size = 0x8, scoped, tag = 'scoped memory for tpu_custom_call.1']
    #allocation6 [shape = 'u8[4096]{0}', space=vmem, size = 0x1000, scoped, tag = 'input window, operand 1']
    #allocation7 [shape = 's32[2]{0}', space=sflag, size = 0x8, scoped, tag = 'scoped memory for tpu_custom_call.1']
    #allocation8 [shape = 'u8[8192]{0}', space=vmem, size = 0x2000, scoped, tag = 'input window, operand 2']
    #allocation9 [shape = 'u8[512]{0}', space=vmem, size = 0x400, scoped, tag = 'input window, operand 3, single buffered']
    #allocation10 [shape = 's32[1]{0}', space=sflag, size = 0x4, scoped, tag = 'scoped memory for tpu_custom_call.1']
    #allocation11 [shape = 'u8[512]{0}', space=vmem, size = 0x400, scoped, tag = 'input window, operand 4, single buffered']
    #allocation12 [shape = 'u8[512]{0}', space=vmem, size = 0x400, scoped, tag = 'input window, operand 5, single buffered']
    #allocation13 [shape = 's32[1]{0}', space=sflag, size = 0x4, scoped, tag = 'scoped memory for tpu_custom_call.1']
    #allocation14 [shape = 'u8[512]{0}', space=vmem, size = 0x400, scoped, tag = 'input window, operand 6, single buffered']
    #allocation15 [shape = 'u8[8192]{0}', space=vmem, size = 0x2000, scoped, tag = 'input window, operand 7, single buffered']
    #allocation16 [shape = 's32[1]{0}', space=sflag, size = 0x4, scoped, tag = 'scoped memory for tpu_custom_call.1']
    #allocation17 [shape = 'u8[8192]{0}', space=vmem, size = 0x2000, scoped, tag = 'output window, operand 0']
    %13 = vsyncpa [#allocation4], 0
    %s14 = scalar_lea.sflag [#allocation4], 1
    %15 = vsyncpa %s14, 0
    %16 = vsyncpa [#allocation7], 0
    %s17 = scalar_lea.sflag [#allocation7], 1
    %18 = vsyncpa %s17, 0
    %19 = vsyncpa [#allocation10], 0
    %20 = vsyncpa [#allocation13], 0
    %21 = vsyncpa [#allocation16], 0
    %22 = vsyncpa [#allocation5], 0
    %s23 = scalar_lea.sflag [#allocation5], 1
    %24 = vsyncpa %s23, 0
    loop: start=0, step=1, limit=4
    $region2: #{tpu_custom_call.1} parent=1 // loop_pre_header
      _
    $region3: #{tpu_custom_call.1} parent=1 // loop_header
      %s26 = sphi 0, %s30
      %p27 = scmp.ge.s32.totalorder %s26, 4
      %s33 = sphi 0, %s45
      %s34 = sphi 0, %s41
      %s35 = sphi 0, %s33
      %s36 = sphi 0, %s34
      %s37 = sphi 0, %s35
      %s38 = sphi 0, %s36
      %s50 = sphi 0, %s52
      %s53 = sphi 0, %s50
      %s54 = sphi 0, %s53
      %s70 = sphi 0, %s54
      %s76 = sphi 0, %s78
      %s79 = sphi 0, %s76
      %s80 = sphi 0, %s79
      %s96 = sphi 0, %s80
      %s102 = sphi 0, %s104
      %s105 = sphi 0, %s102
      %s106 = sphi 0, %s105
      %s122 = sphi 0, %s106
      %s126 = sphi 0, %s126
      %s128 = sphi 0, %s126
      %s129 = sphi 0, %s128
      %s143 = sphi 0, %s129
      %s147 = sphi 0, %s147
      %s149 = sphi 0, %s147
      %s150 = sphi 0, %s149
      %s164 = sphi 0, %s150
      %s168 = sphi 0, %s168
      %s170 = sphi 0, %s168
      %s171 = sphi 0, %s170
      %s185 = sphi 0, %s171
      %s189 = sphi 0, %s189
      %s191 = sphi 0, %s189
      %s192 = sphi 0, %s191
      %s206 = sphi 0, %s192
      %s210 = sphi 0, %s210
      %s212 = sphi 0, %s210
      %s213 = sphi 0, %s212
      %s227 = sphi 0, %s213
      %s235 = sphi 0, %s237
      %s238 = sphi 0, %s235
      %s239 = sphi 0, %s238
      %s255 = sphi 0, %s239
    $region4: #{tpu_custom_call.1} parent=1 // loop_header_branch
      %29 = sbr.rel (%p27) target = $region8
    $region5: #{tpu_custom_call.1} parent=1 // loop_body
      %s31 = ssub.s32 %s26, 1
      %s32 = ssub.s32 %s26, 2
      %s39 = sadd.s32 1, %s34
      %p40 = scmp.ge.s32.totalorder %s39, 1
      %s41 = scalar_select %p40, 0, %s39
      %s42 = sadd.s32 1, %s33
      %s43 = scalar_select %p40, %s42, %s33
      %p44 = scmp.ge.s32.totalorder %s43, 2
      %s45 = scalar_select %p44, 0, %s43
      %s46 = ssub.s32 %s33, %s45
      %s47 = ssub.s32 %s34, %s41
      %s48 = sor.u32 %s46, %s47
      %p49 = scmp.eq.s32.totalorder %s48, 0
      %s51 = sadd.s32 %s50, 1
      %s52 = scalar_select %p49, %s50, %s51
      %p55 = pneg %p49
      %p56 = scmp.eq.s32.totalorder %s26, 1
      %p57 = por %p55, %p56
      %p58 = scmp.ne.s32.totalorder %s50, %s53
      %p59 = scmp.eq.s32.totalorder %s26, 0
      %p60 = por %p58, %p59
      %p61 = scmp.ne.s32.totalorder %s50, %s53
      %p62 = scmp.eq.s32.totalorder %s31, 1
      %p63 = por %p61, %p62
      %p64 = scmp.ne.s32.totalorder %s53, %s54
      %p65 = scmp.eq.s32.totalorder %s31, 0
      %p66 = por %p64, %p65
      %p67 = scmp.ne.s32.totalorder %s53, %s54
      %p68 = scmp.eq.s32.totalorder %s32, 1
      %p69 = por %p67, %p68
      %p71 = scmp.ne.s32.totalorder %s54, %s70
      %p72 = scmp.eq.s32.totalorder %s32, 0
      %p73 = por %p71, %p72
      %s74 = ssub.s32 %s33, %s45
      %p75 = scmp.eq.s32.totalorder %s74, 0
      %s77 = sadd.s32 %s76, 1
      %s78 = scalar_select %p75, %s76, %s77
      %p81 = pneg %p75
      %p82 = scmp.eq.s32.totalorder %s26, 1
      %p83 = por %p81, %p82
      %p84 = scmp.ne.s32.totalorder %s76, %s79
      %p85 = scmp.eq.s32.totalorder %s26, 0
      %p86 = por %p84, %p85
      %p87 = scmp.ne.s32.totalorder %s76, %s79
      %p88 = scmp.eq.s32.totalorder %s31, 1
      %p89 = por %p87, %p88
      %p90 = scmp.ne.s32.totalorder %s79, %s80
      %p91 = scmp.eq.s32.totalorder %s31, 0
      %p92 = por %p90, %p91
      %p93 = scmp.ne.s32.totalorder %s79, %s80
      %p94 = scmp.eq.s32.totalorder %s32, 1
      %p95 = por %p93, %p94
      %p97 = scmp.ne.s32.totalorder %s80, %s96
      %p98 = scmp.eq.s32.totalorder %s32, 0
      %p99 = por %p97, %p98
      %s100 = ssub.s32 %s33, %s45
      %p101 = scmp.eq.s32.totalorder %s100, 0
      %s103 = sadd.s32 %s102, 1
      %s104 = scalar_select %p101, %s102, %s103
      %p107 = pneg %p101
      %p108 = scmp.eq.s32.totalorder %s26, 1
      %p109 = por %p107, %p108
      %p110 = scmp.ne.s32.totalorder %s102, %s105
      %p111 = scmp.eq.s32.totalorder %s26, 0
      %p112 = por %p110, %p111
      %p113 = scmp.ne.s32.totalorder %s102, %s105
      %p114 = scmp.eq.s32.totalorder %s31, 1
      %p115 = por %p113, %p114
      %p116 = scmp.ne.s32.totalorder %s105, %s106
      %p117 = scmp.eq.s32.totalorder %s31, 0
      %p118 = por %p116, %p117
      %p119 = scmp.ne.s32.totalorder %s105, %s106
      %p120 = scmp.eq.s32.totalorder %s32, 1
      %p121 = por %p119, %p120
      %p123 = scmp.ne.s32.totalorder %s106, %s122
      %p124 = scmp.eq.s32.totalorder %s32, 0
      %p125 = por %p123, %p124
      %s127 = sadd.s32 %s126, 1
      %p130 = scmp.eq.s32.totalorder %s26, 1
      %p131 = scmp.ne.s32.totalorder %s126, %s128
      %p132 = scmp.eq.s32.totalorder %s26, 0
      %p133 = por %p131, %p132
      %p134 = scmp.ne.s32.totalorder %s126, %s128
      %p135 = scmp.eq.s32.totalorder %s31, 1
      %p136 = por %p134, %p135
      %p137 = scmp.ne.s32.totalorder %s128, %s129
      %p138 = scmp.eq.s32.totalorder %s31, 0
      %p139 = por %p137, %p138
      %p140 = scmp.ne.s32.totalorder %s128, %s129
      %p141 = scmp.eq.s32.totalorder %s32, 1
      %p142 = por %p140, %p141
      %p144 = scmp.ne.s32.totalorder %s129, %s143
      %p145 = scmp.eq.s32.totalorder %s32, 0
      %p146 = por %p144, %p145
      %s148 = sadd.s32 %s147, 1
      %p151 = scmp.eq.s32.totalorder %s26, 1
      %p152 = scmp.ne.s32.totalorder %s147, %s149
      %p153 = scmp.eq.s32.totalorder %s26, 0
      %p154 = por %p152, %p153
      %p155 = scmp.ne.s32.totalorder %s147, %s149
      %p156 = scmp.eq.s32.totalorder %s31, 1
      %p157 = por %p155, %p156
      %p158 = scmp.ne.s32.totalorder %s149, %s150
      %p159 = scmp.eq.s32.totalorder %s31, 0
      %p160 = por %p158, %p159
      %p161 = scmp.ne.s32.totalorder %s149, %s150
      %p162 = scmp.eq.s32.totalorder %s32, 1
      %p163 = por %p161, %p162
      %p165 = scmp.ne.s32.totalorder %s150, %s164
      %p166 = scmp.eq.s32.totalorder %s32, 0
      %p167 = por %p165, %p166
      %s169 = sadd.s32 %s168, 1
      %p172 = scmp.eq.s32.totalorder %s26, 1
      %p173 = scmp.ne.s32.totalorder %s168, %s170
      %p174 = scmp.eq.s32.totalorder %s26, 0
      %p175 = por %p173, %p174
      %p176 = scmp.ne.s32.totalorder %s168, %s170
      %p177 = scmp.eq.s32.totalorder %s31, 1
      %p178 = por %p176, %p177
      %p179 = scmp.ne.s32.totalorder %s170, %s171
      %p180 = scmp.eq.s32.totalorder %s31, 0
      %p181 = por %p179, %p180
      %p182 = scmp.ne.s32.totalorder %s170, %s171
      %p183 = scmp.eq.s32.totalorder %s32, 1
      %p184 = por %p182, %p183
      %p186 = scmp.ne.s32.totalorder %s171, %s185
      %p187 = scmp.eq.s32.totalorder %s32, 0
      %p188 = por %p186, %p187
      %s190 = sadd.s32 %s189, 1
      %p193 = scmp.eq.s32.totalorder %s26, 1
      %p194 = scmp.ne.s32.totalorder %s189, %s191
      %p195 = scmp.eq.s32.totalorder %s26, 0
      %p196 = por %p194, %p195
      %p197 = scmp.ne.s32.totalorder %s189, %s191
      %p198 = scmp.eq.s32.totalorder %s31, 1
      %p199 = por %p197, %p198
      %p200 = scmp.ne.s32.totalorder %s191, %s192
      %p201 = scmp.eq.s32.totalorder %s31, 0
      %p202 = por %p200, %p201
      %p203 = scmp.ne.s32.totalorder %s191, %s192
      %p204 = scmp.eq.s32.totalorder %s32, 1
      %p205 = por %p203, %p204
      %p207 = scmp.ne.s32.totalorder %s192, %s206
      %p208 = scmp.eq.s32.totalorder %s32, 0
      %p209 = por %p207, %p208
      %s211 = sadd.s32 %s210, 1
      %p214 = scmp.eq.s32.totalorder %s26, 1
      %p215 = scmp.ne.s32.totalorder %s210, %s212
      %p216 = scmp.eq.s32.totalorder %s26, 0
      %p217 = por %p215, %p216
      %p218 = scmp.ne.s32.totalorder %s210, %s212
      %p219 = scmp.eq.s32.totalorder %s31, 1
      %p220 = por %p218, %p219
      %p221 = scmp.ne.s32.totalorder %s212, %s213
      %p222 = scmp.eq.s32.totalorder %s31, 0
      %p223 = por %p221, %p222
      %p224 = scmp.ne.s32.totalorder %s212, %s213
      %p225 = scmp.eq.s32.totalorder %s32, 1
      %p226 = por %p224, %p225
      %p228 = scmp.ne.s32.totalorder %s213, %s227
      %p229 = scmp.eq.s32.totalorder %s32, 0
      %p230 = por %p228, %p229
      %s231 = ssub.s32 %s33, %s45
      %s232 = ssub.s32 %s34, %s41
      %s233 = sor.u32 %s231, %s232
      %p234 = scmp.eq.s32.totalorder %s233, 0
      %s236 = sadd.s32 %s235, 1
      %s237 = scalar_select %p234, %s235, %s236
      %p240 = pneg %p234
      %p241 = scmp.eq.s32.totalorder %s26, 1
      %p242 = por %p240, %p241
      %p243 = scmp.ne.s32.totalorder %s235, %s238
      %p244 = scmp.eq.s32.totalorder %s26, 0
      %p245 = por %p243, %p244
      %p246 = scmp.ne.s32.totalorder %s235, %s238
      %p247 = scmp.eq.s32.totalorder %s31, 1
      %p248 = por %p246, %p247
      %p249 = scmp.ne.s32.totalorder %s238, %s239
      %p250 = scmp.eq.s32.totalorder %s31, 0
      %p251 = por %p249, %p250
      %p252 = scmp.ne.s32.totalorder %s238, %s239
      %p253 = scmp.eq.s32.totalorder %s32, 1
      %p254 = por %p252, %p253
      %p256 = scmp.ne.s32.totalorder %s239, %s255
      %p257 = scmp.eq.s32.totalorder %s32, 0
      %p258 = por %p256, %p257
      %p259 = scmp.le.s32.totalorder 1, %s26
      %p260 = scmp.lt.s32.totalorder %s26, 3
      %p261 = pnand %p259, %p260
      %p262 = pneg %p261
      // Predicated region
      $region9: #{tpu_custom_call.1} parent=5 // pred_check
        _
      $region10: #{tpu_custom_call.1} parent=5 // pred_check_branch
        %264 = sbr.rel (%p261) target = $region12
      $region11: #{tpu_custom_call.1} parent=5 // pred_region
        %s265 = ssub.s32 %s26, 1
        // Predicated region
        $region13: #{tpu_custom_call.1} parent=11 // pred_check
          %p266 = pneg %p139
        $region14: #{tpu_custom_call.1} parent=11 // pred_check_branch
          %268 = sbr.rel (%p266) target = $region16
        $region15: #{tpu_custom_call.1} parent=11 // pred_region
          %s270 = ssub.s32 16, 16
          %271 = vsyncadd [#allocation10], %s270
          %s273 = sshll.u32 [#allocation9], 4
          %s274 = int_to_ptr.vmem [resolvable:$true] %s273
          %276 = dma.hbm_to_vmem [thread:$0]  %s3, 16, %s274, [#allocation10]
        $region16: #{tpu_custom_call.1} parent=11 // pred_fallthru
          _
        // Predicated region
        $region17: #{tpu_custom_call.1} parent=11 // pred_check
          %p277 = pneg %p160
        $region18: #{tpu_custom_call.1} parent=11 // pred_check_branch
          %279 = sbr.rel (%p277) target = $region20
        $region19: #{tpu_custom_call.1} parent=11 // pred_region
          %s281 = ssub.s32 16, 16
          %282 = vsyncadd [#allocation10], %s281
          %s284 = sshll.u32 [#allocation11], 4
          %s285 = int_to_ptr.vmem [resolvable:$true] %s284
          %287 = dma.hbm_to_vmem [thread:$0]  %s4, 16, %s285, [#allocation10]
        $region20: #{tpu_custom_call.1} parent=11 // pred_fallthru
          _
        // Predicated region
        $region21: #{tpu_custom_call.1} parent=11 // pred_check
          %p288 = pneg %p181
        $region22: #{tpu_custom_call.1} parent=11 // pred_check_branch
          %290 = sbr.rel (%p288) target = $region24
        $region23: #{tpu_custom_call.1} parent=11 // pred_region
          %s292 = ssub.s32 16, 16
          %293 = vsyncadd [#allocation13], %s292
          %s295 = sshll.u32 [#allocation12], 4
          %s296 = int_to_ptr.vmem [resolvable:$true] %s295
          %298 = dma.hbm_to_vmem [thread:$0]  %s5, 16, %s296, [#allocation13]
        $region24: #{tpu_custom_call.1} parent=11 // pred_fallthru
          _
        // Predicated region
        $region25: #{tpu_custom_call.1} parent=11 // pred_check
          %p299 = pneg %p202
        $region26: #{tpu_custom_call.1} parent=11 // pred_check_branch
          %301 = sbr.rel (%p299) target = $region28
        $region27: #{tpu_custom_call.1} parent=11 // pred_region
          %s303 = ssub.s32 16, 16
          %304 = vsyncadd [#allocation13], %s303
          %s306 = sshll.u32 [#allocation14], 4
          %s307 = int_to_ptr.vmem [resolvable:$true] %s306
          %309 = dma.hbm_to_vmem [thread:$0]  %s6, 16, %s307, [#allocation13]
        $region28: #{tpu_custom_call.1} parent=11 // pred_fallthru
          _
        // Predicated region
        $region29: #{tpu_custom_call.1} parent=11 // pred_check
          %p310 = pneg %p223
        $region30: #{tpu_custom_call.1} parent=11 // pred_check_branch
          %312 = sbr.rel (%p310) target = $region32
        $region31: #{tpu_custom_call.1} parent=11 // pred_region
          %s314 = ssub.s32 256, 256
          %315 = vsyncadd [#allocation16], %s314
          %s316 = sshll.u32 [#allocation15], 4
          %s317 = int_to_ptr.vmem [resolvable:$true] %s316
          %322 = dma.hbm_to_vmem [thread:$0]  %s7, 256, %s317, [#allocation16], 64, 64, 4
        $region32: #{tpu_custom_call.1} parent=11 // pred_fallthru
          _
      $region12: #{tpu_custom_call.1} parent=5 // pred_fallthru
        _
      %p323 = scmp.lt.s32.totalorder %s26, 2
      // Predicated region
      $region33: #{tpu_custom_call.1} parent=5 // pred_check
        %p324 = pneg %p323
      $region34: #{tpu_custom_call.1} parent=5 // pred_check_branch
        %326 = sbr.rel (%p324) target = $region36
      $region35: #{tpu_custom_call.1} parent=5 // pred_region
        // Predicated region
        $region37: #{tpu_custom_call.1} parent=35 // pred_check
          %p327 = pneg %p60
        $region38: #{tpu_custom_call.1} parent=35 // pred_check_branch
          %329 = sbr.rel (%p327) target = $region40
        $region39: #{tpu_custom_call.1} parent=35 // pred_region
          %s330 = sand.u32 %s50, 1
          %s331 = scalar_lea.sflag [#allocation4], %s330
          %s332 = sand.u32 %s50, 1
          %s333 = smul.addr %s332, 32
          %s334 = scalar_lea.vmem [#allocation3], %s333
          %s336 = ssub.s32 512, 512
          %337 = vsyncadd %s331, %s336
          %s338 = smul.addr %s33, 4
          %s339 = sadd.s32 %s34, %s338
          %s340 = smul.addr %s339, 128
          %s341 = scalar_lea.hbm %s0, %s340
          %s342 = sshll.u32 %s334, 4
          %s343 = int_to_ptr.vmem [resolvable:$true] %s342
          %348 = dma.hbm_to_vmem [thread:$0]  %s341, 512, %s343, %s331, 128, 128, 8
        $region40: #{tpu_custom_call.1} parent=35 // pred_fallthru
          _
        // Predicated region
        $region41: #{tpu_custom_call.1} parent=35 // pred_check
          %p349 = pneg %p86
        $region42: #{tpu_custom_call.1} parent=35 // pred_check_branch
          %351 = sbr.rel (%p349) target = $region44
        $region43: #{tpu_custom_call.1} parent=35 // pred_region
          %s352 = sand.u32 %s26, 1
          %s353 = scalar_lea.sflag [#allocation7], %s352
          %s354 = sand.u32 %s76, 1
          %s355 = smul.addr %s354, 4
          %s356 = scalar_lea.vmem [#allocation6], %s355
          %s358 = ssub.s32 64, 64
          %359 = vsyncadd %s353, %s358
          %s360 = smul.addr %s33, 64
          %s361 = scalar_lea.hbm %s1, %s360
          %s363 = sshll.u32 %s356, 4
          %s364 = int_to_ptr.vmem [resolvable:$true] %s363
          %366 = dma.hbm_to_vmem [thread:$0]  %s361, 64, %s364, %s353
        $region44: #{tpu_custom_call.1} parent=35 // pred_fallthru
          _
        // Predicated region
        $region45: #{tpu_custom_call.1} parent=35 // pred_check
          %p367 = pneg %p112
        $region46: #{tpu_custom_call.1} parent=35 // pred_check_branch
          %369 = sbr.rel (%p367) target = $region48
        $region47: #{tpu_custom_call.1} parent=35 // pred_region
          %s370 = sand.u32 %s26, 1
          %s371 = scalar_lea.sflag [#allocation7], %s370
          %s372 = sand.u32 %s102, 1
          %s373 = smul.addr %s372, 8
          %s374 = scalar_lea.vmem [#allocation8], %s373
          %s376 = ssub.s32 128, 128
          %377 = vsyncadd %s371, %s376
          %s378 = smul.addr %s33, 2
          %s379 = smul.addr %s378, 64
          %s380 = scalar_lea.hbm %s2, %s379
          %s381 = sshll.u32 %s374, 4
          %s382 = int_to_ptr.vmem [resolvable:$true] %s381
          %387 = dma.hbm_to_vmem [thread:$0]  %s380, 128, %s382, %s371, 64, 64, 4
        $region48: #{tpu_custom_call.1} parent=35 // pred_fallthru
          _
      $region36: #{tpu_custom_call.1} parent=5 // pred_fallthru
        _
      %p388 = scmp.le.s32.totalorder 1, %s26
      %p389 = scmp.lt.s32.totalorder %s26, 3
      %p390 = pnand %p388, %p389
      %p391 = pneg %p390
      // Predicated region
      $region49: #{tpu_custom_call.1} parent=5 // pred_check
        _
      $region50: #{tpu_custom_call.1} parent=5 // pred_check_branch
        %393 = sbr.rel (%p390) target = $region52
      $region51: #{tpu_custom_call.1} parent=5 // pred_region
        %s394 = ssub.s32 %s26, 1
        %s395 = sand.u32 %s53, 1
        %s396 = scalar_lea.sflag [#allocation4], %s395
        %s397 = sand.u32 %s53, 1
        %s398 = smul.addr %s397, 32
        %s399 = scalar_lea.vmem [#allocation3], %s398
        // Predicated region
        $region53: #{tpu_custom_call.1} parent=51 // pred_check
          %p400 = pneg %p66
        $region54: #{tpu_custom_call.1} parent=51 // pred_check_branch
          %402 = sbr.rel (%p400) target = $region56
        $region55: #{tpu_custom_call.1} parent=51 // pred_region
          %403 = dma.done %s396, 512
        $region56: #{tpu_custom_call.1} parent=51 // pred_fallthru
          _
        %s404 = sand.u32 %s31, 1
        %s405 = scalar_lea.sflag [#allocation7], %s404
        %s406 = sand.u32 %s79, 1
        %s407 = smul.addr %s406, 4
        %s408 = scalar_lea.vmem [#allocation6], %s407
        // Predicated region
        $region57: #{tpu_custom_call.1} parent=51 // pred_check
          %p409 = pneg %p92
        $region58: #{tpu_custom_call.1} parent=51 // pred_check_branch
          %411 = sbr.rel (%p409) target = $region60
        $region59: #{tpu_custom_call.1} parent=51 // pred_region
          %412 = dma.done %s405, 64
        $region60: #{tpu_custom_call.1} parent=51 // pred_fallthru
          _
        %s413 = sand.u32 %s31, 1
        %s414 = scalar_lea.sflag [#allocation7], %s413
        %s415 = sand.u32 %s105, 1
        %s416 = smul.addr %s415, 8
        %s417 = scalar_lea.vmem [#allocation8], %s416
        // Predicated region
        $region61: #{tpu_custom_call.1} parent=51 // pred_check
          %p418 = pneg %p118
        $region62: #{tpu_custom_call.1} parent=51 // pred_check_branch
          %420 = sbr.rel (%p418) target = $region64
        $region63: #{tpu_custom_call.1} parent=51 // pred_region
          %421 = dma.done %s414, 128
        $region64: #{tpu_custom_call.1} parent=51 // pred_fallthru
          _
        // Predicated region
        $region65: #{tpu_custom_call.1} parent=51 // pred_check
          %p422 = pneg %p139
        $region66: #{tpu_custom_call.1} parent=51 // pred_check_branch
          %424 = sbr.rel (%p422) target = $region68
        $region67: #{tpu_custom_call.1} parent=51 // pred_region
          %425 = dma.done [#allocation10], 16
        $region68: #{tpu_custom_call.1} parent=51 // pred_fallthru
          _
        // Predicated region
        $region69: #{tpu_custom_call.1} parent=51 // pred_check
          %p426 = pneg %p160
        $region70: #{tpu_custom_call.1} parent=51 // pred_check_branch
          %428 = sbr.rel (%p426) target = $region72
        $region71: #{tpu_custom_call.1} parent=51 // pred_region
          %429 = dma.done [#allocation10], 16
        $region72: #{tpu_custom_call.1} parent=51 // pred_fallthru
          _
        // Predicated region
        $region73: #{tpu_custom_call.1} parent=51 // pred_check
          %p430 = pneg %p181
        $region74: #{tpu_custom_call.1} parent=51 // pred_check_branch
          %432 = sbr.rel (%p430) target = $region76
        $region75: #{tpu_custom_call.1} parent=51 // pred_region
          %433 = dma.done [#allocation13], 16
        $region76: #{tpu_custom_call.1} parent=51 // pred_fallthru
          _
        // Predicated region
        $region77: #{tpu_custom_call.1} parent=51 // pred_check
          %p434 = pneg %p202
        $region78: #{tpu_custom_call.1} parent=51 // pred_check_branch
          %436 = sbr.rel (%p434) target = $region80
        $region79: #{tpu_custom_call.1} parent=51 // pred_region
          %437 = dma.done [#allocation13], 16
        $region80: #{tpu_custom_call.1} parent=51 // pred_fallthru
          _
        // Predicated region
        $region81: #{tpu_custom_call.1} parent=51 // pred_check
          %p438 = pneg %p223
        $region82: #{tpu_custom_call.1} parent=51 // pred_check_branch
          %440 = sbr.rel (%p438) target = $region84
        $region83: #{tpu_custom_call.1} parent=51 // pred_region
          %441 = dma.done [#allocation16], 256
        $region84: #{tpu_custom_call.1} parent=51 // pred_fallthru
          _
        %s442 = sand.u32 %s53, 1
        %s443 = scalar_lea.sflag [#allocation4], %s442
        %s444 = sand.u32 %s53, 1
        %s445 = smul.addr %s444, 32
        %s446 = scalar_lea.vmem [#allocation3], %s445
        %p447 = pneg %p66
        %p448 = pneg %p63
        %s449 = sand.u32 %s31, 1
        %s450 = scalar_lea.sflag [#allocation7], %s449
        %s451 = sand.u32 %s79, 1
        %s452 = smul.addr %s451, 4
        %s453 = scalar_lea.vmem [#allocation6], %s452
        %p454 = pneg %p92
        %p455 = pneg %p89
        %s456 = sand.u32 %s31, 1
        %s457 = scalar_lea.sflag [#allocation7], %s456
        %s458 = sand.u32 %s105, 1
        %s459 = smul.addr %s458, 8
        %s460 = scalar_lea.vmem [#allocation8], %s459
        %p461 = pneg %p118
        %p462 = pneg %p115
        %p463 = pneg %p139
        %p464 = pneg %p136
        %p465 = pneg %p160
        %p466 = pneg %p157
        %p467 = pneg %p181
        %p468 = pneg %p178
        %p469 = pneg %p202
        %p470 = pneg %p199
        %p471 = pneg %p223
        %p472 = pneg %p220
        %p473 = pneg %p251
        %p474 = pneg %p248
        %s475 = sand.u32 %s238, 1
        %s476 = scalar_lea.sflag [#allocation5], %s475
        %s477 = sand.u32 %s238, 1
        %s478 = smul.addr %s477, 8
        %s479 = scalar_lea.vmem [#allocation17], %s478
        %v481 = vld [vmem:[%s399] sm:$0xff]
        %v482 = vld [vmem:[%s399 + $0x8] sm:$0xff]
        %v483 = vld [vmem:[%s399 + $0x10] sm:$0xff]
        %v484 = vld [vmem:[%s399 + $0x18] sm:$0xff]
        %v485 = vld [vmem:[%s408] sm:$0xf]
        %v486 = vld [vmem:[%s417] sm:$0xf]
        %v487 = vld [vmem:[%s417 + $0x4] sm:$0xf]
        %v488 = vld [vmem:[#allocation9] sm:$0x1]
        %v489 = vld [vmem:[#allocation11] sm:$0x1]
        %vm490 = vcmask 64512
        %v491 = vsel %vm490, %v481, 0.0
        %492 = vadd.xlane.f32.xlu0 %v491
        %v493 = vpop.xlane.xlu0 %492
        %v494 = vsel %vm490, %v482, 0.0
        %495 = vadd.xlane.f32.xlu0 %v494
        %v496 = vpop.xlane.xlu0 %495
        %v497 = vsel %vm490, %v483, 0.0
        %498 = vadd.xlane.f32.xlu0 %v497
        %v499 = vpop.xlane.xlu0 %498
        %v500 = vsel %vm490, %v484, 0.0
        %501 = vadd.xlane.f32.xlu0 %v500
        %v502 = vpop.xlane.xlu0 %501
        %v503 = vrcp.pop 8.0
        %v504 = vmul.f32 %v493, %v503
        %v505 = vmul.f32 %v496, %v503
        %v506 = vmul.f32 %v499, %v503
        %v507 = vmul.f32 %v502, %v503
        %v508 = vsub.f32 %v481, %v504
        %v509 = vsub.f32 %v482, %v505
        %v510 = vsub.f32 %v483, %v506
        %v511 = vsub.f32 %v484, %v507
        %v512 = vmul.f32 %v508, %v508
        %v513 = vmul.f32 %v509, %v509
        %v514 = vmul.f32 %v510, %v510
        %v515 = vmul.f32 %v511, %v511
        %v516 = vsel %vm490, %v512, 0.0
        %517 = vadd.xlane.f32.xlu0 %v516
        %v518 = vpop.xlane.xlu0 %517
        %v519 = vsel %vm490, %v513, 0.0
        %520 = vadd.xlane.f32.xlu0 %v519
        %v521 = vpop.xlane.xlu0 %520
        %v522 = vsel %vm490, %v514, 0.0
        %523 = vadd.xlane.f32.xlu0 %v522
        %v524 = vpop.xlane.xlu0 %523
        %v525 = vsel %vm490, %v515, 0.0
        %526 = vadd.xlane.f32.xlu0 %v525
        %v527 = vpop.xlane.xlu0 %526
        %v528 = vmul.f32 %v518, %v503
        %v529 = vmul.f32 %v521, %v503
        %v530 = vmul.f32 %v524, %v503
        %v531 = vmul.f32 %v527, %v503
        %v532 = vadd.f32 %v528, 1e-05
        %v533 = vadd.f32 %v529, 1e-05
        %v534 = vadd.f32 %v530, 1e-05
        %v535 = vadd.f32 %v531, 1e-05
        %v536 = vrsqrt.pop %v532
        %v537 = vrsqrt.pop %v533
        %v538 = vrsqrt.pop %v534
        %v539 = vrsqrt.pop %v535
        %v540 = vmul.f32 %v508, %v536
        %v541 = vmul.f32 %v509, %v537
        %v542 = vmul.f32 %v510, %v538
        %v543 = vmul.f32 %v511, %v539
        %v545 = vlaneseq
        %v546 = vshrl.u32 %v545, 7
        %v547 = vsub.s32 0, %v546
        %v548 = vrot.slane %v488, %v547
        %v550 = vmul.f32 %v540, %v548
        %v551 = vmul.f32 %v541, %v548
        %v552 = vmul.f32 %v542, %v548
        %v553 = vmul.f32 %v543, %v548
        %v555 = vlaneseq
        %v556 = vshrl.u32 %v555, 7
        %v557 = vsub.s32 0, %v556
        %v558 = vrot.slane %v489, %v557
        %v560 = vadd.f32 %v550, %v558
        %v561 = vadd.f32 %v551, %v558
        %v562 = vadd.f32 %v552, %v558
        %v563 = vadd.f32 %v553, %v558
        %v564 = vpack.c.bf16 %v561, %v560
        %v565 = vpack.c.bf16 %v563, %v562
        %v567 = vsel %vm490, %v564, 0
        %v570 = vsel %vm490, %v565, 0
        %vm572 = vcmask 1043456
        %v574 = vsel %vm572, %v485, 0
        %576 = vmatprep.subr.bf16.mxu0 0
        %577 = vmatpush1.bf16.msra.mxu0 %v574
        %578 = vmatprep.subr.bf16.mxu0 0
        %579 = vmatpush1.bf16.msra.mxu0 0
        %580 = vmatprep.subr.bf16.mxu0 0
        %581 = vmatpush1.bf16.msra.mxu0 0
        %582 = vmatprep.subr.bf16.mxu0 0
        %583 = vmatpush1.bf16.msra.mxu0 0
        %584 = vmatprep.subr.bf16.mxu0 0
        %585 = vmatpush1.bf16.msra.mxu0 0
        %586 = vmatprep.subr.bf16.mxu0 0
        %587 = vmatpush1.bf16.msra.mxu0 0
        %588 = vmatprep.subr.bf16.mxu0 0
        %589 = vmatpush1.bf16.msra.mxu0 0
        %590 = vmatprep.subr.bf16.mxu0 0
        %591 = vmatpush1.bf16.msra.mxu0 0
        %592 = vmatprep.subr.bf16.mxu0 0
        %593 = vmatpush1.bf16.msra.mxu0 0
        %594 = vmatprep.subr.bf16.mxu0 0
        %595 = vmatpush1.bf16.msra.mxu0 0
        %596 = vmatprep.subr.bf16.mxu0 0
        %597 = vmatpush1.bf16.msra.mxu0 0
        %598 = vmatprep.subr.bf16.mxu0 0
        %599 = vmatpush1.bf16.msra.mxu0 0
        %600 = vmatprep.subr.bf16.mxu0 0
        %601 = vmatpush1.bf16.msra.mxu0 0
        %602 = vmatprep.subr.bf16.mxu0 0
        %603 = vmatpush1.bf16.msra.mxu0 0
        %604 = vmatprep.subr.bf16.mxu0 0
        %605 = vmatpush1.bf16.msra.mxu0 0
        %606 = vmatprep.subr.bf16.mxu0 0
        %607 = vmatpush1.bf16.msra.mxu0 0
        %608 = vmatprep.mubr.bf16.mxu0 0
        %609 = vmatmul.mubr.bf16.gmra.mrb[0].mxu0 %v567
        %v610 = vpop.f32.mrb[0].mxu0
        %v611 = vadd.f32 0.0, %v610
        %v612 = vpop.f32.mrb[0].mxu0
        %v613 = vpop.f32.mrb[0].mxu0
        %v614 = vadd.f32 0.0, %v613
        %v615 = vpop.f32.mrb[0].mxu0
        %616 = vmatprep.mubr.bf16.mxu0 0
        %617 = vmatmul.mubr.bf16.gmra.mrb[0].mxu0 %v570
        %v618 = vpop.f32.mrb[0].mxu0
        %v619 = vadd.f32 0.0, %v618
        %v620 = vpop.f32.mrb[0].mxu0
        %v621 = vpop.f32.mrb[0].mxu0
        %v622 = vadd.f32 0.0, %v621
        %v623 = vpop.f32.mrb[0].mxu0
        %624 = vdwg.mxu0
        %vm625 = vcmask 130048
        %v626 = vsel %vm625, %v611, -inf
        %627 = vmax.xlane.f32.xlu0 %v626
        %v628 = vpop.xlane.xlu0 %627
        %v629 = vsel %vm625, %v614, -inf
        %630 = vmax.xlane.f32.xlu0 %v629
        %v631 = vpop.xlane.xlu0 %630
        %v632 = vsel %vm625, %v619, -inf
        %633 = vmax.xlane.f32.xlu0 %v632
        %v634 = vpop.xlane.xlu0 %633
        %v635 = vsel %vm625, %v622, -inf
        %636 = vmax.xlane.f32.xlu0 %v635
        %v637 = vpop.xlane.xlu0 %636
        %v638 = vsub.f32 %v611, %v628
        %v639 = vsub.f32 %v614, %v631
        %v640 = vsub.f32 %v619, %v634
        %v641 = vsub.f32 %v622, %v637
        %v642 = vmul.f32 %v638, 1.442695
        %v643 = vpow.pop %v642
        %v644 = vmul.f32 %v639, 1.442695
        %v645 = vpow.pop %v644
        %v646 = vmul.f32 %v640, 1.442695
        %v647 = vpow.pop %v646
        %v648 = vmul.f32 %v641, 1.442695
        %v649 = vpow.pop %v648
        %v650 = vsel %vm625, %v643, 0.0
        %651 = vadd.xlane.f32.xlu0 %v650
        %v652 = vpop.xlane.xlu0 %651
        %v653 = vsel %vm625, %v645, 0.0
        %654 = vadd.xlane.f32.xlu0 %v653
        %v655 = vpop.xlane.xlu0 %654
        %v656 = vsel %vm625, %v647, 0.0
        %657 = vadd.xlane.f32.xlu0 %v656
        %v658 = vpop.xlane.xlu0 %657
        %v659 = vsel %vm625, %v649, 0.0
        %660 = vadd.xlane.f32.xlu0 %v659
        %v661 = vpop.xlane.xlu0 %660
        %v662 = vpack.c.bf16 %v645, %v643
        %v663 = vpack.c.bf16 %v649, %v647
        %v666 = vunpack.c.l.b16 %v486
        %v667 = vunpack.c.l.b16 %v487
        %v668 = vpack.c.b16 %v667, %v666
        %v671 = vsel %vm625, %v662, 0
        %v674 = vsel %vm625, %v663, 0
        %676 = vmatprep.subr.bf16.mxu0 0
        %677 = vmatpush1.bf16.msra.mxu0 %v668
        %678 = vmatprep.subr.bf16.mxu0 0
        %679 = vmatpush1.bf16.msra.mxu0 0
        %680 = vmatprep.subr.bf16.mxu0 0
        %681 = vmatpush1.bf16.msra.mxu0 0
        %682 = vmatprep.subr.bf16.mxu0 0
        %683 = vmatpush1.bf16.msra.mxu0 0
        %684 = vmatprep.subr.bf16.mxu0 0
        %685 = vmatpush1.bf16.msra.mxu0 0
        %686 = vmatprep.subr.bf16.mxu0 0
        %687 = vmatpush1.bf16.msra.mxu0 0
        %688 = vmatprep.subr.bf16.mxu0 0
        %689 = vmatpush1.bf16.msra.mxu0 0
        %690 = vmatprep.subr.bf16.mxu0 0
        %691 = vmatpush1.bf16.msra.mxu0 0
        %692 = vmatprep.subr.bf16.mxu0 0
        %693 = vmatpush1.bf16.msra.mxu0 0
        %694 = vmatprep.subr.bf16.mxu0 0
        %695 = vmatpush1.bf16.msra.mxu0 0
        %696 = vmatprep.subr.bf16.mxu0 0
        %697 = vmatpush1.bf16.msra.mxu0 0
        %698 = vmatprep.subr.bf16.mxu0 0
        %699 = vmatpush1.bf16.msra.mxu0 0
        %700 = vmatprep.subr.bf16.mxu0 0
        %701 = vmatpush1.bf16.msra.mxu0 0
        %702 = vmatprep.subr.bf16.mxu0 0
        %703 = vmatpush1.bf16.msra.mxu0 0
        %704 = vmatprep.subr.bf16.mxu0 0
        %705 = vmatpush1.bf16.msra.mxu0 0
        %706 = vmatprep.subr.bf16.mxu0 0
        %707 = vmatpush1.bf16.msra.mxu0 0
        %708 = vmatprep.mubr.bf16.mxu0 0
        %709 = vmatmul.mubr.bf16.gmra.mrb[0].mxu0 %v671
        %v710 = vpop.f32.mrb[0].mxu0
        %v711 = vadd.f32 0.0, %v710
        %v712 = vpop.f32.mrb[0].mxu0
        %v713 = vpop.f32.mrb[0].mxu0
        %v714 = vadd.f32 0.0, %v713
        %v715 = vpop.f32.mrb[0].mxu0
        %716 = vmatprep.mubr.bf16.mxu0 0
        %717 = vmatmul.mubr.bf16.gmra.mrb[0].mxu0 %v674
        %v718 = vpop.f32.mrb[0].mxu0
        %v719 = vadd.f32 0.0, %v718
        %v720 = vpop.f32.mrb[0].mxu0
        %v721 = vpop.f32.mrb[0].mxu0
        %v722 = vadd.f32 0.0, %v721
        %v723 = vpop.f32.mrb[0].mxu0
        %724 = vdwg.mxu0
        %v725 = vrcp.pop %v652
        %v726 = vrcp.pop %v655
        %v727 = vrcp.pop %v658
        %v728 = vrcp.pop %v661
        %v729 = vmul.f32 %v711, %v725
        %v730 = vmul.f32 %v714, %v726
        %v731 = vmul.f32 %v719, %v727
        %v732 = vmul.f32 %v722, %v728
        %733 = vst.msk [vmem:[#allocation2] sm:$0xff] %vm490, %v729
        %735 = vrot.lane.b32.xlu0 %v730, 8
        %v736 = vpop.permute.xlu0 %735
        %vm738 = vcmask 130112
        %739 = vst.msk [vmem:[#allocation2] sm:$0xff] %vm738, %v736
        %741 = vrot.lane.b32.xlu0 %v731, 16
        %v742 = vpop.permute.xlu0 %741
        %vm744 = vcmask 195712
        %745 = vst.msk [vmem:[#allocation2] sm:$0xff] %vm744, %v742
        %747 = vrot.lane.b32.xlu0 %v732, 24
        %v748 = vpop.permute.xlu0 %747
        %vm750 = vcmask 261312
        %751 = vst.msk [vmem:[#allocation2] sm:$0xff] %vm750, %v748
        %v752 = vld [vmem:[#allocation2] sm:$0xff]
        %v753 = vld [vmem:[#allocation12] sm:$0x1]
        %v754 = vld [vmem:[#allocation14] sm:$0x1]
        %vm755 = vcmask 261120
        %v756 = vsel %vm755, %v752, 0.0
        %757 = vadd.xlane.f32.xlu0 %v756
        %v758 = vpop.xlane.xlu0 %757
        %v759 = vrcp.pop 32.0
        %v760 = vmul.f32 %v758, %v759
        %v761 = vsub.f32 %v752, %v760
        %v762 = vmul.f32 %v761, %v761
        %v763 = vsel %vm755, %v762, 0.0
        %764 = vadd.xlane.f32.xlu0 %v763
        %v765 = vpop.xlane.xlu0 %764
        %v766 = vmul.f32 %v765, %v759
        %v767 = vadd.f32 %v766, 1e-05
        %v768 = vrsqrt.pop %v767
        %v769 = vmul.f32 %v761, %v768
        %v771 = vlaneseq
        %v772 = vshrl.u32 %v771, 7
        %v773 = vsub.s32 0, %v772
        %v774 = vrot.slane %v753, %v773
        %v776 = vmul.f32 %v769, %v774
        %v778 = vlaneseq
        %v779 = vshrl.u32 %v778, 7
        %v780 = vsub.s32 0, %v779
        %v781 = vrot.slane %v754, %v780
        %v783 = vadd.f32 %v776, %v781
        %v784 = vpack.c.bf16 %v783, %v783
        %v785 = vld [vmem:[#allocation15] sm:$0xf]
        %v786 = vld [vmem:[#allocation15 + $0x4] sm:$0xf]
        %v787 = vld [vmem:[#allocation15 + $0x8] sm:$0xf]
        %v788 = vld [vmem:[#allocation15 + $0xc] sm:$0xf]
        %v793 = vunpack.c.l.b16 %v785
        %v794 = vunpack.c.l.b16 %v786
        %v795 = vunpack.c.l.b16 %v787
        %v796 = vunpack.c.l.b16 %v788
        %v797 = vpack.c.b16 %v794, %v793
        %v798 = vpack.c.b16 %v796, %v795
        %v802 = vsel %vm755, %v784, 0
        %804 = vmatprep.subr.bf16.mxu0 0
        %805 = vmatpush1.bf16.msra.mxu0 %v797
        %806 = vmatprep.subr.bf16.mxu0 0
        %807 = vmatpush1.bf16.msra.mxu0 %v798
        %808 = vmatprep.subr.bf16.mxu0 0
        %809 = vmatpush1.bf16.msra.mxu0 0
        %810 = vmatprep.subr.bf16.mxu0 0
        %811 = vmatpush1.bf16.msra.mxu0 0
        %812 = vmatprep.subr.bf16.mxu0 0
        %813 = vmatpush1.bf16.msra.mxu0 0
        %814 = vmatprep.subr.bf16.mxu0 0
        %815 = vmatpush1.bf16.msra.mxu0 0
        %816 = vmatprep.subr.bf16.mxu0 0
        %817 = vmatpush1.bf16.msra.mxu0 0
        %818 = vmatprep.subr.bf16.mxu0 0
        %819 = vmatpush1.bf16.msra.mxu0 0
        %820 = vmatprep.subr.bf16.mxu0 0
        %821 = vmatpush1.bf16.msra.mxu0 0
        %822 = vmatprep.subr.bf16.mxu0 0
        %823 = vmatpush1.bf16.msra.mxu0 0
        %824 = vmatprep.subr.bf16.mxu0 0
        %825 = vmatpush1.bf16.msra.mxu0 0
        %826 = vmatprep.subr.bf16.mxu0 0
        %827 = vmatpush1.bf16.msra.mxu0 0
        %828 = vmatprep.subr.bf16.mxu0 0
        %829 = vmatpush1.bf16.msra.mxu0 0
        %830 = vmatprep.subr.bf16.mxu0 0
        %831 = vmatpush1.bf16.msra.mxu0 0
        %832 = vmatprep.subr.bf16.mxu0 0
        %833 = vmatpush1.bf16.msra.mxu0 0
        %834 = vmatprep.subr.bf16.mxu0 0
        %835 = vmatpush1.bf16.msra.mxu0 0
        %836 = vmatprep.mubr.bf16.mxu0 0
        %837 = vmatmul.mubr.bf16.gmra.mrb[0].mxu0 %v802
        %v838 = vpop.f32.mrb[0].mxu0
        %v839 = vadd.f32 0.0, %v838
        %v840 = vpop.f32.mrb[0].mxu0
        %v841 = vpop.f32.mrb[0].mxu0
        %v842 = vpop.f32.mrb[0].mxu0
        %843 = vdwg.mxu0
        %844 = vst.msk [vmem:[%s479] sm:$0xff] %vm755, %v839
        %s845 = sand.u32 %s238, 1
        %s846 = scalar_lea.sflag [#allocation5], %s845
        %s847 = sand.u32 %s238, 1
        %s848 = smul.addr %s847, 8
        %s849 = scalar_lea.vmem [#allocation17], %s848
        // Predicated region
        $region85: #{tpu_custom_call.1} parent=51 // pred_check
          %p850 = pneg %p248
        $region86: #{tpu_custom_call.1} parent=51 // pred_check_branch
          %852 = sbr.rel (%p850) target = $region88
        $region87: #{tpu_custom_call.1} parent=51 // pred_region
          %s854 = ssub.s32 128, 128
          %855 = vsyncadd %s846, %s854
          %s856 = sadd.s32 %s36, %s35
          %s857 = smul.addr %s856, 128
          %s858 = scalar_lea.hbm %s8, %s857
          %s860 = sshll.u32 %s849, 4
          %s861 = int_to_ptr.vmem [resolvable:$true] %s860
          %863 = dma.vmem_to_hbm [thread:$0]  %s861, 128, %s858, %s846
        $region88: #{tpu_custom_call.1} parent=51 // pred_fallthru
          _
      $region52: #{tpu_custom_call.1} parent=5 // pred_fallthru
        _
      %p864 = scmp.le.s32.totalorder 2, %s26
      // Predicated region
      $region89: #{tpu_custom_call.1} parent=5 // pred_check
        %p865 = pneg %p864
      $region90: #{tpu_custom_call.1} parent=5 // pred_check_branch
        %867 = sbr.rel (%p865) target = $region92
      $region91: #{tpu_custom_call.1} parent=5 // pred_region
        %s868 = ssub.s32 %s26, 2
        // Predicated region
        $region93: #{tpu_custom_call.1} parent=91 // pred_check
          %p869 = pneg %p254
        $region94: #{tpu_custom_call.1} parent=91 // pred_check_branch
          %871 = sbr.rel (%p869) target = $region96
        $region95: #{tpu_custom_call.1} parent=91 // pred_region
          %s872 = sand.u32 %s239, 1
          %s873 = scalar_lea.sflag [#allocation5], %s872
          %s874 = sand.u32 %s239, 1
          %s875 = smul.addr %s874, 8
          %s876 = scalar_lea.vmem [#allocation17], %s875
          %877 = dma.done %s873, 128
        $region96: #{tpu_custom_call.1} parent=91 // pred_fallthru
          _
      $region92: #{tpu_custom_call.1} parent=5 // pred_fallthru
        _
    $region6: #{tpu_custom_call.1} parent=1 // loop_footer
      %s30 = sadd.s32 1, %s26
    $region7: #{tpu_custom_call.1} parent=1 // loop_footer_branch
      %25 = sbr.rel target = $region3
    $region8: #{tpu_custom_call.1} parent=1 // loop_exit
      _
    %878 = vsyncpa [#allocation4], 1
    %s879 = scalar_lea.sflag [#allocation4], 1
    %880 = vsyncpa %s879, 1
    %881 = vsyncpa [#allocation7], 1
    %s882 = scalar_lea.sflag [#allocation7], 1
    %883 = vsyncpa %s882, 1
    %884 = vsyncpa [#allocation10], 1
    %885 = vsyncpa [#allocation13], 1
    %886 = vsyncpa [#allocation16], 1
    %887 = vsyncpa [#allocation5], 1
    %s888 = scalar_lea.sflag [#allocation5], 1
    %889 = vsyncpa %s888, 1

// kernel: tpu_custom_call.1
$region0: #{tpu_custom_call.1}
  #allocation0 [shape = 'u32[]', space=smem, size = 0x4, offset = 0x4, fixed_abs, tag = 'smem constant byte address 0x4 - core index']
  #allocation1 [shape = 'u32[144,128]{1,0:T(1,128)}', space=vmem, size = 0x12000, scoped, tag = 'internal scratch']
  #allocation2 [shape = 'f32[8,32]{1,0:T(8,128)}', space=vmem, size = 0x1000, scoped, tag = 'scratch operand']
  %s0 = inlined_call_operand.hbm [shape: f32[2,4,8,8], index: 0, kind: input, shape index: {}]
  %s1 = inlined_call_operand.hbm [shape: bf16[2,8,16], index: 1, kind: input, shape index: {}]
  %s2 = inlined_call_operand.hbm [shape: bf16[2,16,8], index: 2, kind: input, shape index: {}]
  %s3 = inlined_call_operand.hbm [shape: f32[1,8], index: 3, kind: input, shape index: {}]
  %s4 = inlined_call_operand.hbm [shape: f32[1,8], index: 4, kind: input, shape index: {}]
  %s5 = inlined_call_operand.hbm [shape: f32[1,32], index: 5, kind: input, shape index: {}]
  %s6 = inlined_call_operand.hbm [shape: f32[1,32], index: 6, kind: input, shape index: {}]
  %s7 = inlined_call_operand.hbm [shape: bf16[32,32], index: 7, kind: input, shape index: {}]
  %s8 = inlined_call_operand.hbm [shape: f32[2,8,32], index: 8, kind: output, shape index: {}]
  %s9 = sld [smem:[#allocation0]]
  $region97: #{tpu_custom_call.1} parent=0
    _
  %s11 = ssub.s32 1, %s9
  %s12 = scalar_select 0, %s11, %s9
  $region1: #{tpu_custom_call.1} parent=0
    #allocation3 [shape = 'u8[32768]{0}', space=vmem, size = 0x8000, scoped, tag = 'input window, operand 0']
    #allocation4 [shape = 's32[2]{0}', space=sflag, size = 0x8, scoped, tag = 'scoped memory for tpu_custom_call.1']
    #allocation5 [shape = 's32[2]{0}', space=sflag, size = 0x8, scoped, tag = 'scoped memory for tpu_custom_call.1']
    #allocation6 [shape = 'u8[4096]{0}', space=vmem, size = 0x1000, scoped, tag = 'input window, operand 1']
    #allocation7 [shape = 's32[2]{0}', space=sflag, size = 0x8, scoped, tag = 'scoped memory for tpu_custom_call.1']
    #allocation8 [shape = 'u8[8192]{0}', space=vmem, size = 0x2000, scoped, tag = 'input window, operand 2']
    #allocation9 [shape = 'u8[512]{0}', space=vmem, size = 0x400, scoped, tag = 'input window, operand 3, single buffered']
    #allocation10 [shape = 's32[1]{0}', space=sflag, size = 0x4, scoped, tag = 'scoped memory for tpu_custom_call.1']
    #allocation11 [shape = 'u8[512]{0}', space=vmem, size = 0x400, scoped, tag = 'input window, operand 4, single buffered']
    #allocation12 [shape = 'u8[512]{0}', space=vmem, size = 0x400, scoped, tag = 'input window, operand 5, single buffered']
    #allocation13 [shape = 's32[1]{0}', space=sflag, size = 0x4, scoped, tag = 'scoped memory for tpu_custom_call.1']
    #allocation14 [shape = 'u8[512]{0}', space=vmem, size = 0x400, scoped, tag = 'input window, operand 6, single buffered']
    #allocation15 [shape = 'u8[8192]{0}', space=vmem, size = 0x2000, scoped, tag = 'input window, operand 7, single buffered']
    #allocation16 [shape = 's32[1]{0}', space=sflag, size = 0x4, scoped, tag = 'scoped memory for tpu_custom_call.1']
    #allocation17 [shape = 'u8[8192]{0}', space=vmem, size = 0x2000, scoped, tag = 'output window, operand 0']
    %13 = vsyncpa [#allocation4], 0
    %s14 = scalar_lea.sflag [#allocation4], 1
    %15 = vsyncpa %s14, 0
    %16 = vsyncpa [#allocation7], 0
    %s17 = scalar_lea.sflag [#allocation7], 1
    %18 = vsyncpa %s17, 0
    %19 = vsyncpa [#allocation10], 0
    %20 = vsyncpa [#allocation13], 0
    %21 = vsyncpa [#allocation16], 0
    %22 = vsyncpa [#allocation5], 0
    %s23 = scalar_lea.sflag [#allocation5], 1
    %24 = vsyncpa %s23, 0
    loop: start=0, step=1, limit=4
    $region2: #{tpu_custom_call.1} parent=1 // loop_pre_header
      _
    $region3: #{tpu_custom_call.1} parent=1 // loop_header
      %s26 = sphi 0, %s30
      %p27 = scmp.ge.s32.totalorder %s26, 4
      %s33 = sphi 0, %s45
      %s34 = sphi 0, %s41
      %s35 = sphi 0, %s33
      %s36 = sphi 0, %s34
      %s37 = sphi 0, %s35
      %s38 = sphi 0, %s36
      %s50 = sphi 0, %s52
      %s53 = sphi 0, %s50
      %s54 = sphi 0, %s53
      %s70 = sphi 0, %s54
      %s76 = sphi 0, %s78
      %s79 = sphi 0, %s76
      %s80 = sphi 0, %s79
      %s96 = sphi 0, %s80
      %s102 = sphi 0, %s104
      %s105 = sphi 0, %s102
      %s106 = sphi 0, %s105
      %s122 = sphi 0, %s106
      %s126 = sphi 0, %s126
      %s128 = sphi 0, %s126
      %s129 = sphi 0, %s128
      %s143 = sphi 0, %s129
      %s147 = sphi 0, %s147
      %s149 = sphi 0, %s147
      %s150 = sphi 0, %s149
      %s164 = sphi 0, %s150
      %s168 = sphi 0, %s168
      %s170 = sphi 0, %s168
      %s171 = sphi 0, %s170
      %s185 = sphi 0, %s171
      %s189 = sphi 0, %s189
      %s191 = sphi 0, %s189
      %s192 = sphi 0, %s191
      %s206 = sphi 0, %s192
      %s210 = sphi 0, %s210
      %s212 = sphi 0, %s210
      %s213 = sphi 0, %s212
      %s227 = sphi 0, %s213
      %s235 = sphi 0, %s237
      %s238 = sphi 0, %s235
      %s239 = sphi 0, %s238
      %s255 = sphi 0, %s239
    $region4: #{tpu_custom_call.1} parent=1 // loop_header_branch
      %29 = sbr.rel (%p27) target = $region8
    $region5: #{tpu_custom_call.1} parent=1 // loop_body
      %s31 = ssub.s32 %s26, 1
      %s32 = ssub.s32 %s26, 2
      %s39 = sadd.s32 1, %s34
      %p40 = scmp.ge.s32.totalorder %s39, 1
      %s41 = scalar_select %p40, 0, %s39
      %s42 = sadd.s32 1, %s33
      %s43 = scalar_select %p40, %s42, %s33
      %p44 = scmp.ge.s32.totalorder %s43, 2
      %s45 = scalar_select %p44, 0, %s43
      %s46 = ssub.s32 %s33, %s45
      %s47 = ssub.s32 %s34, %s41
      %s48 = sor.u32 %s46, %s47
      %p49 = scmp.eq.s32.totalorder %s48, 0
      %s51 = sadd.s32 %s50, 1
      %s52 = scalar_select %p49, %s50, %s51
      %p55 = pneg %p49
      %p56 = scmp.eq.s32.totalorder %s26, 1
      %p57 = por %p55, %p56
      %p58 = scmp.ne.s32.totalorder %s50, %s53
      %p59 = scmp.eq.s32.totalorder %s26, 0
      %p60 = por %p58, %p59
      %p61 = scmp.ne.s32.totalorder %s50, %s53
      %p62 = scmp.eq.s32.totalorder %s31, 1
      %p63 = por %p61, %p62
      %p64 = scmp.ne.s32.totalorder %s53, %s54
      %p65 = scmp.eq.s32.totalorder %s31, 0
      %p66 = por %p64, %p65
      %p67 = scmp.ne.s32.totalorder %s53, %s54
      %p68 = scmp.eq.s32.totalorder %s32, 1
      %p69 = por %p67, %p68
      %p71 = scmp.ne.s32.totalorder %s54, %s70
      %p72 = scmp.eq.s32.totalorder %s32, 0
      %p73 = por %p71, %p72
      %s74 = ssub.s32 %s33, %s45
      %p75 = scmp.eq.s32.totalorder %s74, 0
      %s77 = sadd.s32 %s76, 1
      %s78 = scalar_select %p75, %s76, %s77
      %p81 = pneg %p75
      %p82 = scmp.eq.s32.totalorder %s26, 1
      %p83 = por %p81, %p82
      %p84 = scmp.ne.s32.totalorder %s76, %s79
      %p85 = scmp.eq.s32.totalorder %s26, 0
      %p86 = por %p84, %p85
      %p87 = scmp.ne.s32.totalorder %s76, %s79
      %p88 = scmp.eq.s32.totalorder %s31, 1
      %p89 = por %p87, %p88
      %p90 = scmp.ne.s32.totalorder %s79, %s80
      %p91 = scmp.eq.s32.totalorder %s31, 0
      %p92 = por %p90, %p91
      %p93 = scmp.ne.s32.totalorder %s79, %s80
      %p94 = scmp.eq.s32.totalorder %s32, 1
      %p95 = por %p93, %p94
      %p97 = scmp.ne.s32.totalorder %s80, %s96
      %p98 = scmp.eq.s32.totalorder %s32, 0
      %p99 = por %p97, %p98
      %s100 = ssub.s32 %s33, %s45
      %p101 = scmp.eq.s32.totalorder %s100, 0
      %s103 = sadd.s32 %s102, 1
      %s104 = scalar_select %p101, %s102, %s103
      %p107 = pneg %p101
      %p108 = scmp.eq.s32.totalorder %s26, 1
      %p109 = por %p107, %p108
      %p110 = scmp.ne.s32.totalorder %s102, %s105
      %p111 = scmp.eq.s32.totalorder %s26, 0
      %p112 = por %p110, %p111
      %p113 = scmp.ne.s32.totalorder %s102, %s105
      %p114 = scmp.eq.s32.totalorder %s31, 1
      %p115 = por %p113, %p114
      %p116 = scmp.ne.s32.totalorder %s105, %s106
      %p117 = scmp.eq.s32.totalorder %s31, 0
      %p118 = por %p116, %p117
      %p119 = scmp.ne.s32.totalorder %s105, %s106
      %p120 = scmp.eq.s32.totalorder %s32, 1
      %p121 = por %p119, %p120
      %p123 = scmp.ne.s32.totalorder %s106, %s122
      %p124 = scmp.eq.s32.totalorder %s32, 0
      %p125 = por %p123, %p124
      %s127 = sadd.s32 %s126, 1
      %p130 = scmp.eq.s32.totalorder %s26, 1
      %p131 = scmp.ne.s32.totalorder %s126, %s128
      %p132 = scmp.eq.s32.totalorder %s26, 0
      %p133 = por %p131, %p132
      %p134 = scmp.ne.s32.totalorder %s126, %s128
      %p135 = scmp.eq.s32.totalorder %s31, 1
      %p136 = por %p134, %p135
      %p137 = scmp.ne.s32.totalorder %s128, %s129
      %p138 = scmp.eq.s32.totalorder %s31, 0
      %p139 = por %p137, %p138
      %p140 = scmp.ne.s32.totalorder %s128, %s129
      %p141 = scmp.eq.s32.totalorder %s32, 1
      %p142 = por %p140, %p141
      %p144 = scmp.ne.s32.totalorder %s129, %s143
      %p145 = scmp.eq.s32.totalorder %s32, 0
      %p146 = por %p144, %p145
      %s148 = sadd.s32 %s147, 1
      %p151 = scmp.eq.s32.totalorder %s26, 1
      %p152 = scmp.ne.s32.totalorder %s147, %s149
      %p153 = scmp.eq.s32.totalorder %s26, 0
      %p154 = por %p152, %p153
      %p155 = scmp.ne.s32.totalorder %s147, %s149
      %p156 = scmp.eq.s32.totalorder %s31, 1
      %p157 = por %p155, %p156
      %p158 = scmp.ne.s32.totalorder %s149, %s150
      %p159 = scmp.eq.s32.totalorder %s31, 0
      %p160 = por %p158, %p159
      %p161 = scmp.ne.s32.totalorder %s149, %s150
      %p162 = scmp.eq.s32.totalorder %s32, 1
      %p163 = por %p161, %p162
      %p165 = scmp.ne.s32.totalorder %s150, %s164
      %p166 = scmp.eq.s32.totalorder %s32, 0
      %p167 = por %p165, %p166
      %s169 = sadd.s32 %s168, 1
      %p172 = scmp.eq.s32.totalorder %s26, 1
      %p173 = scmp.ne.s32.totalorder %s168, %s170
      %p174 = scmp.eq.s32.totalorder %s26, 0
      %p175 = por %p173, %p174
      %p176 = scmp.ne.s32.totalorder %s168, %s170
      %p177 = scmp.eq.s32.totalorder %s31, 1
      %p178 = por %p176, %p177
      %p179 = scmp.ne.s32.totalorder %s170, %s171
      %p180 = scmp.eq.s32.totalorder %s31, 0
      %p181 = por %p179, %p180
      %p182 = scmp.ne.s32.totalorder %s170, %s171
      %p183 = scmp.eq.s32.totalorder %s32, 1
      %p184 = por %p182, %p183
      %p186 = scmp.ne.s32.totalorder %s171, %s185
      %p187 = scmp.eq.s32.totalorder %s32, 0
      %p188 = por %p186, %p187
      %s190 = sadd.s32 %s189, 1
      %p193 = scmp.eq.s32.totalorder %s26, 1
      %p194 = scmp.ne.s32.totalorder %s189, %s191
      %p195 = scmp.eq.s32.totalorder %s26, 0
      %p196 = por %p194, %p195
      %p197 = scmp.ne.s32.totalorder %s189, %s191
      %p198 = scmp.eq.s32.totalorder %s31, 1
      %p199 = por %p197, %p198
      %p200 = scmp.ne.s32.totalorder %s191, %s192
      %p201 = scmp.eq.s32.totalorder %s31, 0
      %p202 = por %p200, %p201
      %p203 = scmp.ne.s32.totalorder %s191, %s192
      %p204 = scmp.eq.s32.totalorder %s32, 1
      %p205 = por %p203, %p204
      %p207 = scmp.ne.s32.totalorder %s192, %s206
      %p208 = scmp.eq.s32.totalorder %s32, 0
      %p209 = por %p207, %p208
      %s211 = sadd.s32 %s210, 1
      %p214 = scmp.eq.s32.totalorder %s26, 1
      %p215 = scmp.ne.s32.totalorder %s210, %s212
      %p216 = scmp.eq.s32.totalorder %s26, 0
      %p217 = por %p215, %p216
      %p218 = scmp.ne.s32.totalorder %s210, %s212
      %p219 = scmp.eq.s32.totalorder %s31, 1
      %p220 = por %p218, %p219
      %p221 = scmp.ne.s32.totalorder %s212, %s213
      %p222 = scmp.eq.s32.totalorder %s31, 0
      %p223 = por %p221, %p222
      %p224 = scmp.ne.s32.totalorder %s212, %s213
      %p225 = scmp.eq.s32.totalorder %s32, 1
      %p226 = por %p224, %p225
      %p228 = scmp.ne.s32.totalorder %s213, %s227
      %p229 = scmp.eq.s32.totalorder %s32, 0
      %p230 = por %p228, %p229
      %s231 = ssub.s32 %s33, %s45
      %s232 = ssub.s32 %s34, %s41
      %s233 = sor.u32 %s231, %s232
      %p234 = scmp.eq.s32.totalorder %s233, 0
      %s236 = sadd.s32 %s235, 1
      %s237 = scalar_select %p234, %s235, %s236
      %p240 = pneg %p234
      %p241 = scmp.eq.s32.totalorder %s26, 1
      %p242 = por %p240, %p241
      %p243 = scmp.ne.s32.totalorder %s235, %s238
      %p244 = scmp.eq.s32.totalorder %s26, 0
      %p245 = por %p243, %p244
      %p246 = scmp.ne.s32.totalorder %s235, %s238
      %p247 = scmp.eq.s32.totalorder %s31, 1
      %p248 = por %p246, %p247
      %p249 = scmp.ne.s32.totalorder %s238, %s239
      %p250 = scmp.eq.s32.totalorder %s31, 0
      %p251 = por %p249, %p250
      %p252 = scmp.ne.s32.totalorder %s238, %s239
      %p253 = scmp.eq.s32.totalorder %s32, 1
      %p254 = por %p252, %p253
      %p256 = scmp.ne.s32.totalorder %s239, %s255
      %p257 = scmp.eq.s32.totalorder %s32, 0
      %p258 = por %p256, %p257
      %p259 = scmp.le.s32.totalorder 1, %s26
      %p260 = scmp.lt.s32.totalorder %s26, 3
      %p261 = pnand %p259, %p260
      %p262 = pneg %p261
      // Predicated region
      $region9: #{tpu_custom_call.1} parent=5 // pred_check
        _
      $region10: #{tpu_custom_call.1} parent=5 // pred_check_branch
        %264 = sbr.rel (%p261) target = $region12
      $region11: #{tpu_custom_call.1} parent=5 // pred_region
        %s265 = ssub.s32 %s26, 1
        // Predicated region
        $region13: #{tpu_custom_call.1} parent=11 // pred_check
          %p266 = pneg %p139
        $region14: #{tpu_custom_call.1} parent=11 // pred_check_branch
          %268 = sbr.rel (%p266) target = $region16
        $region15: #{tpu_custom_call.1} parent=11 // pred_region
          %s270 = ssub.s32 16, 16
          %271 = vsyncadd [#allocation10], %s270
          %s273 = sshll.u32 [#allocation9], 4
          %s274 = int_to_ptr.vmem [resolvable:$true] %s273
          %276 = dma.hbm_to_vmem [thread:$0]  %s3, 16, %s274, [#allocation10]
        $region16: #{tpu_custom_call.1} parent=11 // pred_fallthru
          _
        // Predicated region
        $region17: #{tpu_custom_call.1} parent=11 // pred_check
          %p277 = pneg %p160
        $region18: #{tpu_custom_call.1} parent=11 // pred_check_branch
          %279 = sbr.rel (%p277) target = $region20
        $region19: #{tpu_custom_call.1} parent=11 // pred_region
          %s281 = ssub.s32 16, 16
          %282 = vsyncadd [#allocation10], %s281
          %s284 = sshll.u32 [#allocation11], 4
          %s285 = int_to_ptr.vmem [resolvable:$true] %s284
          %287 = dma.hbm_to_vmem [thread:$0]  %s4, 16, %s285, [#allocation10]
        $region20: #{tpu_custom_call.1} parent=11 // pred_fallthru
          _
        // Predicated region
        $region21: #{tpu_custom_call.1} parent=11 // pred_check
          %p288 = pneg %p181
        $region22: #{tpu_custom_call.1} parent=11 // pred_check_branch
          %290 = sbr.rel (%p288) target = $region24
        $region23: #{tpu_custom_call.1} parent=11 // pred_region
          %s292 = ssub.s32 16, 16
          %293 = vsyncadd [#allocation13], %s292
          %s295 = sshll.u32 [#allocation12], 4
          %s296 = int_to_ptr.vmem [resolvable:$true] %s295
          %298 = dma.hbm_to_vmem [thread:$0]  %s5, 16, %s296, [#allocation13]
        $region24: #{tpu_custom_call.1} parent=11 // pred_fallthru
          _
        // Predicated region
        $region25: #{tpu_custom_call.1} parent=11 // pred_check
          %p299 = pneg %p202
        $region26: #{tpu_custom_call.1} parent=11 // pred_check_branch
          %301 = sbr.rel (%p299) target = $region28
        $region27: #{tpu_custom_call.1} parent=11 // pred_region
          %s303 = ssub.s32 16, 16
          %304 = vsyncadd [#allocation13], %s303
          %s306 = sshll.u32 [#allocation14], 4
          %s307 = int_to_ptr.vmem [resolvable:$true] %s306
          %309 = dma.hbm_to_vmem [thread:$0]  %s6, 16, %s307, [#allocation13]
        $region28: #{tpu_custom_call.1} parent=11 // pred_fallthru
          _
        // Predicated region
        $region29: #{tpu_custom_call.1} parent=11 // pred_check
          %p310 = pneg %p223
        $region30: #{tpu_custom_call.1} parent=11 // pred_check_branch
          %312 = sbr.rel (%p310) target = $region32
        $region31: #{tpu_custom_call.1} parent=11 // pred_region
          %s314 = ssub.s32 256, 256
          %315 = vsyncadd [#allocation16], %s314
          %s316 = sshll.u32 [#allocation15], 4
          %s317 = int_to_ptr.vmem [resolvable:$true] %s316
          %322 = dma.hbm_to_vmem [thread:$0]  %s7, 256, %s317, [#allocation16], 64, 64, 4
        $region32: #{tpu_custom_call.1} parent=11 // pred_fallthru
          _
      $region12: #{tpu_custom_call.1} parent=5 // pred_fallthru
        _
      %p323 = scmp.lt.s32.totalorder %s26, 2
      // Predicated region
      $region33: #{tpu_custom_call.1} parent=5 // pred_check
        %p324 = pneg %p323
      $region34: #{tpu_custom_call.1} parent=5 // pred_check_branch
        %326 = sbr.rel (%p324) target = $region36
      $region35: #{tpu_custom_call.1} parent=5 // pred_region
        // Predicated region
        $region37: #{tpu_custom_call.1} parent=35 // pred_check
          %p327 = pneg %p60
        $region38: #{tpu_custom_call.1} parent=35 // pred_check_branch
          %329 = sbr.rel (%p327) target = $region40
        $region39: #{tpu_custom_call.1} parent=35 // pred_region
          %s330 = sand.u32 %s50, 1
          %s331 = scalar_lea.sflag [#allocation4], %s330
          %s332 = sand.u32 %s50, 1
          %s333 = smul.addr %s332, 32
          %s334 = scalar_lea.vmem [#allocation3], %s333
          %s336 = ssub.s32 512, 512
          %337 = vsyncadd %s331, %s336
          %s338 = smul.addr %s33, 4
          %s339 = sadd.s32 %s34, %s338
          %s340 = smul.addr %s339, 128
          %s341 = scalar_lea.hbm %s0, %s340
          %s342 = sshll.u32 %s334, 4
          %s343 = int_to_ptr.vmem [resolvable:$true] %s342
          %348 = dma.hbm_to_vmem [thread:$0]  %s341, 512, %s343, %s331, 128, 128, 8
        $region40: #{tpu_custom_call.1} parent=35 // pred_fallthru
          _
        // Predicated region
        $region41: #{tpu_custom_call.1} parent=35 // pred_check
          %p349 = pneg %p86
        $region42: #{tpu_custom_call.1} parent=35 // pred_check_branch
          %351 = sbr.rel (%p349) target = $region44
        $region43: #{tpu_custom_call.1} parent=35 // pred_region
          %s352 = sand.u32 %s26, 1
          %s353 = scalar_lea.sflag [#allocation7], %s352
          %s354 = sand.u32 %s76, 1
          %s355 = smul.addr %s354, 4
          %s356 = scalar_lea.vmem [#allocation6], %s355
          %s358 = ssub.s32 64, 64
          %359 = vsyncadd %s353, %s358
          %s360 = smul.addr %s33, 64
          %s361 = scalar_lea.hbm %s1, %s360
          %s363 = sshll.u32 %s356, 4
          %s364 = int_to_ptr.vmem [resolvable:$true] %s363
          %366 = dma.hbm_to_vmem [thread:$0]  %s361, 64, %s364, %s353
        $region44: #{tpu_custom_call.1} parent=35 // pred_fallthru
          _
        // Predicated region
        $region45: #{tpu_custom_call.1} parent=35 // pred_check
          %p367 = pneg %p112
        $region46: #{tpu_custom_call.1} parent=35 // pred_check_branch
          %369 = sbr.rel (%p367) target = $region48
        $region47: #{tpu_custom_call.1} parent=35 // pred_region
          %s370 = sand.u32 %s26, 1
          %s371 = scalar_lea.sflag [#allocation7], %s370
          %s372 = sand.u32 %s102, 1
          %s373 = smul.addr %s372, 8
          %s374 = scalar_lea.vmem [#allocation8], %s373
          %s376 = ssub.s32 128, 128
          %377 = vsyncadd %s371, %s376
          %s378 = smul.addr %s33, 2
          %s379 = smul.addr %s378, 64
          %s380 = scalar_lea.hbm %s2, %s379
          %s381 = sshll.u32 %s374, 4
          %s382 = int_to_ptr.vmem [resolvable:$true] %s381
          %387 = dma.hbm_to_vmem [thread:$0]  %s380, 128, %s382, %s371, 64, 64, 4
        $region48: #{tpu_custom_call.1} parent=35 // pred_fallthru
          _
      $region36: #{tpu_custom_call.1} parent=5 // pred_fallthru
        _
      %p388 = scmp.le.s32.totalorder 1, %s26
      %p389 = scmp.lt.s32.totalorder %s26, 3
      %p390 = pnand %p388, %p389
      %p391 = pneg %p390
      // Predicated region
      $region49: #{tpu_custom_call.1} parent=5 // pred_check
        _
      $region50: #{tpu_custom_call.1} parent=5 // pred_check_branch
        %393 = sbr.rel (%p390) target = $region52
      $region51: #{tpu_custom_call.1} parent=5 // pred_region
        %s394 = ssub.s32 %s26, 1
        %s395 = sand.u32 %s53, 1
        %s396 = scalar_lea.sflag [#allocation4], %s395
        %s397 = sand.u32 %s53, 1
        %s398 = smul.addr %s397, 32
        %s399 = scalar_lea.vmem [#allocation3], %s398
        // Predicated region
        $region53: #{tpu_custom_call.1} parent=51 // pred_check
          %p400 = pneg %p66
        $region54: #{tpu_custom_call.1} parent=51 // pred_check_branch
          %402 = sbr.rel (%p400) target = $region56
        $region55: #{tpu_custom_call.1} parent=51 // pred_region
          %403 = dma.done %s396, 512
        $region56: #{tpu_custom_call.1} parent=51 // pred_fallthru
          _
        %s404 = sand.u32 %s31, 1
        %s405 = scalar_lea.sflag [#allocation7], %s404
        %s406 = sand.u32 %s79, 1
        %s407 = smul.addr %s406, 4
        %s408 = scalar_lea.vmem [#allocation6], %s407
        // Predicated region
        $region57: #{tpu_custom_call.1} parent=51 // pred_check
          %p409 = pneg %p92
        $region58: #{tpu_custom_call.1} parent=51 // pred_check_branch
          %411 = sbr.rel (%p409) target = $region60
        $region59: #{tpu_custom_call.1} parent=51 // pred_region
          %412 = dma.done %s405, 64
        $region60: #{tpu_custom_call.1} parent=51 // pred_fallthru
          _
        %s413 = sand.u32 %s31, 1
        %s414 = scalar_lea.sflag [#allocation7], %s413
        %s415 = sand.u32 %s105, 1
        %s416 = smul.addr %s415, 8
        %s417 = scalar_lea.vmem [#allocation8], %s416
        // Predicated region
        $region61: #{tpu_custom_call.1} parent=51 // pred_check
          %p418 = pneg %p118
        $region62: #{tpu_custom_call.1} parent=51 // pred_check_branch
          %420 = sbr.rel (%p418) target = $region64
        $region63: #{tpu_custom_call.1} parent=51 // pred_region
          %421 = dma.done %s414, 128
        $region64: #{tpu_custom_call.1} parent=51 // pred_fallthru
          _
        // Predicated region
        $region65: #{tpu_custom_call.1} parent=51 // pred_check
          %p422 = pneg %p139
        $region66: #{tpu_custom_call.1} parent=51 // pred_check_branch
          %424 = sbr.rel (%p422) target = $region68
        $region67: #{tpu_custom_call.1} parent=51 // pred_region
          %425 = dma.done [#allocation10], 16
        $region68: #{tpu_custom_call.1} parent=51 // pred_fallthru
          _
        // Predicated region
        $region69: #{tpu_custom_call.1} parent=51 // pred_check
          %p426 = pneg %p160
        $region70: #{tpu_custom_call.1} parent=51 // pred_check_branch
          %428 = sbr.rel (%p426) target = $region72
        $region71: #{tpu_custom_call.1} parent=51 // pred_region
          %429 = dma.done [#allocation10], 16
        $region72: #{tpu_custom_call.1} parent=51 // pred_fallthru
          _
        // Predicated region
        $region73: #{tpu_custom_call.1} parent=51 // pred_check
          %p430 = pneg %p181
        $region74: #{tpu_custom_call.1} parent=51 // pred_check_branch
          %432 = sbr.rel (%p430) target = $region76
        $region75: #{tpu_custom_call.1} parent=51 // pred_region
          %433 = dma.done [#allocation13], 16
        $region76: #{tpu_custom_call.1} parent=51 // pred_fallthru
          _
        // Predicated region
        $region77: #{tpu_custom_call.1} parent=51 // pred_check
          %p434 = pneg %p202
        $region78: #{tpu_custom_call.1} parent=51 // pred_check_branch
          %436 = sbr.rel (%p434) target = $region80
        $region79: #{tpu_custom_call.1} parent=51 // pred_region
          %437 = dma.done [#allocation13], 16
        $region80: #{tpu_custom_call.1} parent=51 // pred_fallthru
          _
        // Predicated region
        $region81: #{tpu_custom_call.1} parent=51 // pred_check
          %p438 = pneg %p223
        $region82: #{tpu_custom_call.1} parent=51 // pred_check_branch
          %440 = sbr.rel (%p438) target = $region84
        $region83: #{tpu_custom_call.1} parent=51 // pred_region
          %441 = dma.done [#allocation16], 256
        $region84: #{tpu_custom_call.1} parent=51 // pred_fallthru
          _
        %s442 = sand.u32 %s53, 1
        %s443 = scalar_lea.sflag [#allocation4], %s442
        %s444 = sand.u32 %s53, 1
        %s445 = smul.addr %s444, 32
        %s446 = scalar_lea.vmem [#allocation3], %s445
        %p447 = pneg %p66
        %p448 = pneg %p63
        %s449 = sand.u32 %s31, 1
        %s450 = scalar_lea.sflag [#allocation7], %s449
        %s451 = sand.u32 %s79, 1
        %s452 = smul.addr %s451, 4
        %s453 = scalar_lea.vmem [#allocation6], %s452
        %p454 = pneg %p92
        %p455 = pneg %p89
        %s456 = sand.u32 %s31, 1
        %s457 = scalar_lea.sflag [#allocation7], %s456
        %s458 = sand.u32 %s105, 1
        %s459 = smul.addr %s458, 8
        %s460 = scalar_lea.vmem [#allocation8], %s459
        %p461 = pneg %p118
        %p462 = pneg %p115
        %p463 = pneg %p139
        %p464 = pneg %p136
        %p465 = pneg %p160
        %p466 = pneg %p157
        %p467 = pneg %p181
        %p468 = pneg %p178
        %p469 = pneg %p202
        %p470 = pneg %p199
        %p471 = pneg %p223
        %p472 = pneg %p220
        %p473 = pneg %p251
        %p474 = pneg %p248
        %s475 = sand.u32 %s238, 1
        %s476 = scalar_lea.sflag [#allocation5], %s475
        %s477 = sand.u32 %s238, 1
        %s478 = smul.addr %s477, 8
        %s479 = scalar_lea.vmem [#allocation17], %s478
        %v481 = vld [vmem:[%s399] sm:$0xff]
        %v482 = vld [vmem:[%s399 + $0x8] sm:$0xff]
        %v483 = vld [vmem:[%s399 + $0x10] sm:$0xff]
        %v484 = vld [vmem:[%s399 + $0x18] sm:$0xff]
        %v485 = vld [vmem:[%s408] sm:$0xf]
        %v486 = vld [vmem:[%s417] sm:$0xf]
        %v487 = vld [vmem:[%s417 + $0x4] sm:$0xf]
        %v488 = vld [vmem:[#allocation9] sm:$0x1]
        %v489 = vld [vmem:[#allocation11] sm:$0x1]
        %vm490 = vcmask 64512
        %v491 = vsel %vm490, %v481, 0.0
        %492 = vadd.xlane.f32.xlu0 %v491
        %v493 = vpop.xlane.xlu0 %492
        %v494 = vsel %vm490, %v482, 0.0
        %495 = vadd.xlane.f32.xlu0 %v494
        %v496 = vpop.xlane.xlu0 %495
        %v497 = vsel %vm490, %v483, 0.0
        %498 = vadd.xlane.f32.xlu0 %v497
        %v499 = vpop.xlane.xlu0 %498
        %v500 = vsel %vm490, %v484, 0.0
        %501 = vadd.xlane.f32.xlu0 %v500
        %v502 = vpop.xlane.xlu0 %501
        %v503 = vrcp.pop 8.0
        %v504 = vmul.f32 %v493, %v503
        %v505 = vmul.f32 %v496, %v503
        %v506 = vmul.f32 %v499, %v503
        %v507 = vmul.f32 %v502, %v503
        %v508 = vsub.f32 %v481, %v504
        %v509 = vsub.f32 %v482, %v505
        %v510 = vsub.f32 %v483, %v506
        %v511 = vsub.f32 %v484, %v507
        %v512 = vmul.f32 %v508, %v508
        %v513 = vmul.f32 %v509, %v509
        %v514 = vmul.f32 %v510, %v510
        %v515 = vmul.f32 %v511, %v511
        %v516 = vsel %vm490, %v512, 0.0
        %517 = vadd.xlane.f32.xlu0 %v516
        %v518 = vpop.xlane.xlu0 %517
        %v519 = vsel %vm490, %v513, 0.0
        %520 = vadd.xlane.f32.xlu0 %v519
        %v521 = vpop.xlane.xlu0 %520
        %v522 = vsel %vm490, %v514, 0.0
        %523 = vadd.xlane.f32.xlu0 %v522
        %v524 = vpop.xlane.xlu0 %523
        %v525 = vsel %vm490, %v515, 0.0
        %526 = vadd.xlane.f32.xlu0 %v525
        %v527 = vpop.xlane.xlu0 %526
        %v528 = vmul.f32 %v518, %v503
        %v529 = vmul.f32 %v521, %v503
        %v530 = vmul.f32 %v524, %v503
        %v531 = vmul.f32 %v527, %v503
        %v532 = vadd.f32 %v528, 1e-05
        %v533 = vadd.f32 %v529, 1e-05
        %v534 = vadd.f32 %v530, 1e-05
        %v535 = vadd.f32 %v531, 1e-05
        %v536 = vrsqrt.pop %v532
        %v537 = vrsqrt.pop %v533
        %v538 = vrsqrt.pop %v534
        %v539 = vrsqrt.pop %v535
        %v540 = vmul.f32 %v508, %v536
        %v541 = vmul.f32 %v509, %v537
        %v542 = vmul.f32 %v510, %v538
        %v543 = vmul.f32 %v511, %v539
        %v545 = vlaneseq
        %v546 = vshrl.u32 %v545, 7
        %v547 = vsub.s32 0, %v546
        %v548 = vrot.slane %v488, %v547
        %v550 = vmul.f32 %v540, %v548
        %v551 = vmul.f32 %v541, %v548
        %v552 = vmul.f32 %v542, %v548
        %v553 = vmul.f32 %v543, %v548
        %v555 = vlaneseq
        %v556 = vshrl.u32 %v555, 7
        %v557 = vsub.s32 0, %v556
        %v558 = vrot.slane %v489, %v557
        %v560 = vadd.f32 %v550, %v558
        %v561 = vadd.f32 %v551, %v558
        %v562 = vadd.f32 %v552, %v558
        %v563 = vadd.f32 %v553, %v558
        %v564 = vpack.c.bf16 %v561, %v560
        %v565 = vpack.c.bf16 %v563, %v562
        %v567 = vsel %vm490, %v564, 0
        %v570 = vsel %vm490, %v565, 0
        %vm572 = vcmask 1043456
        %v574 = vsel %vm572, %v485, 0
        %576 = vmatprep.subr.bf16.mxu0 0
        %577 = vmatpush1.bf16.msra.mxu0 %v574
        %578 = vmatprep.subr.bf16.mxu0 0
        %579 = vmatpush1.bf16.msra.mxu0 0
        %580 = vmatprep.subr.bf16.mxu0 0
        %581 = vmatpush1.bf16.msra.mxu0 0
        %582 = vmatprep.subr.bf16.mxu0 0
        %583 = vmatpush1.bf16.msra.mxu0 0
        %584 = vmatprep.subr.bf16.mxu0 0
        %585 = vmatpush1.bf16.msra.mxu0 0
        %586 = vmatprep.subr.bf16.mxu0 0
        %587 = vmatpush1.bf16.msra.mxu0 0
        %588 = vmatprep.subr.bf16.mxu0 0
        %589 = vmatpush1.bf16.msra.mxu0 0
        %590 = vmatprep.subr.bf16.mxu0 0
        %591 = vmatpush1.bf16.msra.mxu0 0
        %592 = vmatprep.subr.bf16.mxu0 0
        %593 = vmatpush1.bf16.msra.mxu0 0
        %594 = vmatprep.subr.bf16.mxu0 0
        %595 = vmatpush1.bf16.msra.mxu0 0
        %596 = vmatprep.subr.bf16.mxu0 0
        %597 = vmatpush1.bf16.msra.mxu0 0
        %598 = vmatprep.subr.bf16.mxu0 0
        %599 = vmatpush1.bf16.msra.mxu0 0
        %600 = vmatprep.subr.bf16.mxu0 0
        %601 = vmatpush1.bf16.msra.mxu0 0
        %602 = vmatprep.subr.bf16.mxu0 0
        %603 = vmatpush1.bf16.msra.mxu0 0
        %604 = vmatprep.subr.bf16.mxu0 0
        %605 = vmatpush1.bf16.msra.mxu0 0
        %606 = vmatprep.subr.bf16.mxu0 0
        %607 = vmatpush1.bf16.msra.mxu0 0
        %608 = vmatprep.mubr.bf16.mxu0 0
        %609 = vmatmul.mubr.bf16.gmra.mrb[0].mxu0 %v567
        %v610 = vpop.f32.mrb[0].mxu0
        %v611 = vadd.f32 0.0, %v610
        %v612 = vpop.f32.mrb[0].mxu0
        %v613 = vpop.f32.mrb[0].mxu0
        %v614 = vadd.f32 0.0, %v613
        %v615 = vpop.f32.mrb[0].mxu0
        %616 = vmatprep.mubr.bf16.mxu0 0
        %617 = vmatmul.mubr.bf16.gmra.mrb[0].mxu0 %v570
        %v618 = vpop.f32.mrb[0].mxu0
        %v619 = vadd.f32 0.0, %v618
        %v620 = vpop.f32.mrb[0].mxu0
        %v621 = vpop.f32.mrb[0].mxu0
        %v622 = vadd.f32 0.0, %v621
        %v623 = vpop.f32.mrb[0].mxu0
        %624 = vdwg.mxu0
        %vm625 = vcmask 130048
        %v626 = vsel %vm625, %v611, -inf
        %627 = vmax.xlane.f32.xlu0 %v626
        %v628 = vpop.xlane.xlu0 %627
        %v629 = vsel %vm625, %v614, -inf
        %630 = vmax.xlane.f32.xlu0 %v629
        %v631 = vpop.xlane.xlu0 %630
        %v632 = vsel %vm625, %v619, -inf
        %633 = vmax.xlane.f32.xlu0 %v632
        %v634 = vpop.xlane.xlu0 %633
        %v635 = vsel %vm625, %v622, -inf
        %636 = vmax.xlane.f32.xlu0 %v635
        %v637 = vpop.xlane.xlu0 %636
        %v638 = vsub.f32 %v611, %v628
        %v639 = vsub.f32 %v614, %v631
        %v640 = vsub.f32 %v619, %v634
        %v641 = vsub.f32 %v622, %v637
        %v642 = vmul.f32 %v638, 1.442695
        %v643 = vpow.pop %v642
        %v644 = vmul.f32 %v639, 1.442695
        %v645 = vpow.pop %v644
        %v646 = vmul.f32 %v640, 1.442695
        %v647 = vpow.pop %v646
        %v648 = vmul.f32 %v641, 1.442695
        %v649 = vpow.pop %v648
        %v650 = vsel %vm625, %v643, 0.0
        %651 = vadd.xlane.f32.xlu0 %v650
        %v652 = vpop.xlane.xlu0 %651
        %v653 = vsel %vm625, %v645, 0.0
        %654 = vadd.xlane.f32.xlu0 %v653
        %v655 = vpop.xlane.xlu0 %654
        %v656 = vsel %vm625, %v647, 0.0
        %657 = vadd.xlane.f32.xlu0 %v656
        %v658 = vpop.xlane.xlu0 %657
        %v659 = vsel %vm625, %v649, 0.0
        %660 = vadd.xlane.f32.xlu0 %v659
        %v661 = vpop.xlane.xlu0 %660
        %v662 = vpack.c.bf16 %v645, %v643
        %v663 = vpack.c.bf16 %v649, %v647
        %v666 = vunpack.c.l.b16 %v486
        %v667 = vunpack.c.l.b16 %v487
        %v668 = vpack.c.b16 %v667, %v666
        %v671 = vsel %vm625, %v662, 0
        %v674 = vsel %vm625, %v663, 0
        %676 = vmatprep.subr.bf16.mxu0 0
        %677 = vmatpush1.bf16.msra.mxu0 %v668
        %678 = vmatprep.subr.bf16.mxu0 0
        %679 = vmatpush1.bf16.msra.mxu0 0
        %680 = vmatprep.subr.bf16.mxu0 0
        %681 = vmatpush1.bf16.msra.mxu0 0
        %682 = vmatprep.subr.bf16.mxu0 0
        %683 = vmatpush1.bf16.msra.mxu0 0
        %684 = vmatprep.subr.bf16.mxu0 0
        %685 = vmatpush1.bf16.msra.mxu0 0
        %686 = vmatprep.subr.bf16.mxu0 0
        %687 = vmatpush1.bf16.msra.mxu0 0
        %688 = vmatprep.subr.bf16.mxu0 0
        %689 = vmatpush1.bf16.msra.mxu0 0
        %690 = vmatprep.subr.bf16.mxu0 0
        %691 = vmatpush1.bf16.msra.mxu0 0
        %692 = vmatprep.subr.bf16.mxu0 0
        %693 = vmatpush1.bf16.msra.mxu0 0
        %694 = vmatprep.subr.bf16.mxu0 0
        %695 = vmatpush1.bf16.msra.mxu0 0
        %696 = vmatprep.subr.bf16.mxu0 0
        %697 = vmatpush1.bf16.msra.mxu0 0
        %698 = vmatprep.subr.bf16.mxu0 0
        %699 = vmatpush1.bf16.msra.mxu0 0
        %700 = vmatprep.subr.bf16.mxu0 0
        %701 = vmatpush1.bf16.msra.mxu0 0
        %702 = vmatprep.subr.bf16.mxu0 0
        %703 = vmatpush1.bf16.msra.mxu0 0
        %704 = vmatprep.subr.bf16.mxu0 0
        %705 = vmatpush1.bf16.msra.mxu0 0
        %706 = vmatprep.subr.bf16.mxu0 0
        %707 = vmatpush1.bf16.msra.mxu0 0
        %708 = vmatprep.mubr.bf16.mxu0 0
        %709 = vmatmul.mubr.bf16.gmra.mrb[0].mxu0 %v671
        %v710 = vpop.f32.mrb[0].mxu0
        %v711 = vadd.f32 0.0, %v710
        %v712 = vpop.f32.mrb[0].mxu0
        %v713 = vpop.f32.mrb[0].mxu0
        %v714 = vadd.f32 0.0, %v713
        %v715 = vpop.f32.mrb[0].mxu0
        %716 = vmatprep.mubr.bf16.mxu0 0
        %717 = vmatmul.mubr.bf16.gmra.mrb[0].mxu0 %v674
        %v718 = vpop.f32.mrb[0].mxu0
        %v719 = vadd.f32 0.0, %v718
        %v720 = vpop.f32.mrb[0].mxu0
        %v721 = vpop.f32.mrb[0].mxu0
        %v722 = vadd.f32 0.0, %v721
        %v723 = vpop.f32.mrb[0].mxu0
        %724 = vdwg.mxu0
        %v725 = vrcp.pop %v652
        %v726 = vrcp.pop %v655
        %v727 = vrcp.pop %v658
        %v728 = vrcp.pop %v661
        %v729 = vmul.f32 %v711, %v725
        %v730 = vmul.f32 %v714, %v726
        %v731 = vmul.f32 %v719, %v727
        %v732 = vmul.f32 %v722, %v728
        %733 = vst.msk [vmem:[#allocation2] sm:$0xff] %vm490, %v729
        %735 = vrot.lane.b32.xlu0 %v730, 8
        %v736 = vpop.permute.xlu0 %735
        %vm738 = vcmask 130112
        %739 = vst.msk [vmem:[#allocation2] sm:$0xff] %vm738, %v736
        %741 = vrot.lane.b32.xlu0 %v731, 16
        %v742 = vpop.permute.xlu0 %741
        %vm744 = vcmask 195712
        %745 = vst.msk [vmem:[#allocation2] sm:$0xff] %vm744, %v742
        %747 = vrot.lane.b32.xlu0 %v732, 24
        %v748 = vpop.permute.xlu0 %747
        %vm750 = vcmask 261312
        %751 = vst.msk [vmem:[#allocation2] sm:$0xff] %vm750, %v748
        %v752 = vld [vmem:[#allocation2] sm:$0xff]
        %v753 = vld [vmem:[#allocation12] sm:$0x1]
        %v754 = vld [vmem:[#allocation14] sm:$0x1]
        %vm755 = vcmask 261120
        %v756 = vsel %vm755, %v752, 0.0
        %757 = vadd.xlane.f32.xlu0 %v756
        %v758 = vpop.xlane.xlu0 %757
        %v759 = vrcp.pop 32.0
        %v760 = vmul.f32 %v758, %v759
        %v761 = vsub.f32 %v752, %v760
        %v762 = vmul.f32 %v761, %v761
        %v763 = vsel %vm755, %v762, 0.0
        %764 = vadd.xlane.f32.xlu0 %v763
        %v765 = vpop.xlane.xlu0 %764
        %v766 = vmul.f32 %v765, %v759
        %v767 = vadd.f32 %v766, 1e-05
        %v768 = vrsqrt.pop %v767
        %v769 = vmul.f32 %v761, %v768
        %v771 = vlaneseq
        %v772 = vshrl.u32 %v771, 7
        %v773 = vsub.s32 0, %v772
        %v774 = vrot.slane %v753, %v773
        %v776 = vmul.f32 %v769, %v774
        %v778 = vlaneseq
        %v779 = vshrl.u32 %v778, 7
        %v780 = vsub.s32 0, %v779
        %v781 = vrot.slane %v754, %v780
        %v783 = vadd.f32 %v776, %v781
        %v784 = vpack.c.bf16 %v783, %v783
        %v785 = vld [vmem:[#allocation15] sm:$0xf]
        %v786 = vld [vmem:[#allocation15 + $0x4] sm:$0xf]
        %v787 = vld [vmem:[#allocation15 + $0x8] sm:$0xf]
        %v788 = vld [vmem:[#allocation15 + $0xc] sm:$0xf]
        %v793 = vunpack.c.l.b16 %v785
        %v794 = vunpack.c.l.b16 %v786
        %v795 = vunpack.c.l.b16 %v787
        %v796 = vunpack.c.l.b16 %v788
        %v797 = vpack.c.b16 %v794, %v793
        %v798 = vpack.c.b16 %v796, %v795
        %v802 = vsel %vm755, %v784, 0
        %804 = vmatprep.subr.bf16.mxu0 0
        %805 = vmatpush1.bf16.msra.mxu0 %v797
        %806 = vmatprep.subr.bf16.mxu0 0
        %807 = vmatpush1.bf16.msra.mxu0 %v798
        %808 = vmatprep.subr.bf16.mxu0 0
        %809 = vmatpush1.bf16.msra.mxu0 0
        %810 = vmatprep.subr.bf16.mxu0 0
        %811 = vmatpush1.bf16.msra.mxu0 0
        %812 = vmatprep.subr.bf16.mxu0 0
        %813 = vmatpush1.bf16.msra.mxu0 0
        %814 = vmatprep.subr.bf16.mxu0 0
        %815 = vmatpush1.bf16.msra.mxu0 0
        %816 = vmatprep.subr.bf16.mxu0 0
        %817 = vmatpush1.bf16.msra.mxu0 0
        %818 = vmatprep.subr.bf16.mxu0 0
        %819 = vmatpush1.bf16.msra.mxu0 0
        %820 = vmatprep.subr.bf16.mxu0 0
        %821 = vmatpush1.bf16.msra.mxu0 0
        %822 = vmatprep.subr.bf16.mxu0 0
        %823 = vmatpush1.bf16.msra.mxu0 0
        %824 = vmatprep.subr.bf16.mxu0 0
        %825 = vmatpush1.bf16.msra.mxu0 0
        %826 = vmatprep.subr.bf16.mxu0 0
        %827 = vmatpush1.bf16.msra.mxu0 0
        %828 = vmatprep.subr.bf16.mxu0 0
        %829 = vmatpush1.bf16.msra.mxu0 0
        %830 = vmatprep.subr.bf16.mxu0 0
        %831 = vmatpush1.bf16.msra.mxu0 0
        %832 = vmatprep.subr.bf16.mxu0 0
        %833 = vmatpush1.bf16.msra.mxu0 0
        %834 = vmatprep.subr.bf16.mxu0 0
        %835 = vmatpush1.bf16.msra.mxu0 0
        %836 = vmatprep.mubr.bf16.mxu0 0
        %837 = vmatmul.mubr.bf16.gmra.mrb[0].mxu0 %v802
        %v838 = vpop.f32.mrb[0].mxu0
        %v839 = vadd.f32 0.0, %v838
        %v840 = vpop.f32.mrb[0].mxu0
        %v841 = vpop.f32.mrb[0].mxu0
        %v842 = vpop.f32.mrb[0].mxu0
        %843 = vdwg.mxu0
        %844 = vst.msk [vmem:[%s479] sm:$0xff] %vm755, %v839
        %s845 = sand.u32 %s238, 1
        %s846 = scalar_lea.sflag [#allocation5], %s845
        %s847 = sand.u32 %s238, 1
        %s848 = smul.addr %s847, 8
        %s849 = scalar_lea.vmem [#allocation17], %s848
        // Predicated region
        $region85: #{tpu_custom_call.1} parent=51 // pred_check
          %p850 = pneg %p248
        $region86: #{tpu_custom_call.1} parent=51 // pred_check_branch
          %852 = sbr.rel (%p850) target = $region88
        $region87: #{tpu_custom_call.1} parent=51 // pred_region
          %s854 = ssub.s32 128, 128
          %855 = vsyncadd %s846, %s854
          %s856 = sadd.s32 %s36, %s35
          %s857 = smul.addr %s856, 128
          %s858 = scalar_lea.hbm %s8, %s857
          %s860 = sshll.u32 %s849, 4
          %s861 = int_to_ptr.vmem [resolvable:$true] %s860
          %863 = dma.vmem_to_hbm [thread:$0]  %s861, 128, %s858, %s846
        $region88: #{tpu_custom_call.1} parent=51 // pred_fallthru
          _
      $region52: #{tpu_custom_call.1} parent=5 // pred_fallthru
        _
      %p864 = scmp.le.s32.totalorder 2, %s26
      // Predicated region
      $region89: #{tpu_custom_call.1} parent=5 // pred_check
        %p865 = pneg %p864
      $region90: #{tpu_custom_call.1} parent=5 // pred_check_branch
        %867 = sbr.rel (%p865) target = $region92
      $region91: #{tpu_custom_call.1} parent=5 // pred_region
        %s868 = ssub.s32 %s26, 2
        // Predicated region
        $region93: #{tpu_custom_call.1} parent=91 // pred_check
          %p869 = pneg %p254
        $region94: #{tpu_custom_call.1} parent=91 // pred_check_branch
          %871 = sbr.rel (%p869) target = $region96
        $region95: #{tpu_custom_call.1} parent=91 // pred_region
          %s872 = sand.u32 %s239, 1
          %s873 = scalar_lea.sflag [#allocation5], %s872
          %s874 = sand.u32 %s239, 1
          %s875 = smul.addr %s874, 8
          %s876 = scalar_lea.vmem [#allocation17], %s875
          %877 = dma.done %s873, 128
        $region96: #{tpu_custom_call.1} parent=91 // pred_fallthru
          _
      $region92: #{tpu_custom_call.1} parent=5 // pred_fallthru
        _
    $region6: #{tpu_custom_call.1} parent=1 // loop_footer
      %s30 = sadd.s32 1, %s26
    $region7: #{tpu_custom_call.1} parent=1 // loop_footer_branch
      %25 = sbr.rel target = $region3
    $region8: #{tpu_custom_call.1} parent=1 // loop_exit
      _
    %878 = vsyncpa [#allocation4], 1
    %s879 = scalar_lea.sflag [#allocation4], 1
    %880 = vsyncpa %s879, 1
    %881 = vsyncpa [#allocation7], 1
    %s882 = scalar_lea.sflag [#allocation7], 1
    %883 = vsyncpa %s882, 1
    %884 = vsyncpa [#allocation10], 1
    %885 = vsyncpa [#allocation13], 1
    %886 = vsyncpa [#allocation16], 1
    %887 = vsyncpa [#allocation5], 1
    %s888 = scalar_lea.sflag [#allocation5], 1
    %889 = vsyncpa %s888, 1

</llo_original>
